<compile_context>
chip_gen: v7x
topology: tpu7x:2x2x1
jax: 0.10.0
libtpu: 0.0.40
codegen_flags: <defaults>
</compile_context>

<pallas_src>
import functools

import jax
import jax.numpy as jnp
from jax.experimental import pallas as pl
from jax.experimental.pallas import tpu as pltpu

MAX_QUESTION_LEN = 30   # question_rindex length in the reference module
MAX_ANSWER_LEN = 30
LANES = 128


def _round_up(x, m):
    return (x + m - 1) // m * m


# ----------------------------------------------------------------------------
# One fused kernel: (embedding ∘ PreprocessLayer) encode for passage+question,
# batched bilinear match logits, and fused argmax predictions.
# Single un-gridded invocation; everything stays resident in VMEM.
# TODO(synk): for large B / passage_len, grid over (B, P-tiles) with
# dimension_semantics=("parallel","parallel") and a running argmax; for large
# vocab, switch the one-hot MXU gather to a manual DMA row-gather
# (memory_space=pl.ANY + pltpu.make_async_copy) instead of a resident table.
# ----------------------------------------------------------------------------
def _fused_multitask_kernel(p_ids_ref, q_ids_ref, tab_ref, bias_ref,
                            logits_ref, pred_ref, *,
                            batch, p_pad, q_pad, q_true):
    v = tab_ref.shape[0]
    dp = tab_ref.shape[1]
    tab = tab_ref[...]                       # [V, Dp] bf16, VMEM-resident
    bias = bias_ref[...]                     # [1, Dp] f32

    def encode(ids_ref, rows):
        ids = ids_ref[...]                                         # [rows,1] i32
        iota = jax.lax.broadcasted_iota(jnp.int32, (rows, v), 1)
        onehot = (iota == ids).astype(jnp.bfloat16)                # [rows, V]
        # Gather via MXU: exactly one non-zero per row -> exact row lookup.
        pre = jnp.dot(onehot, tab, preferred_element_type=jnp.float32)
        return jnp.tanh(pre + bias).astype(jnp.bfloat16)           # [rows, Dp]

    p_enc = encode(p_ids_ref, batch * p_pad).reshape(batch, p_pad, dp)
    q_enc = encode(q_ids_ref, batch * q_pad).reshape(batch, q_pad, dp)

    # MatchLSTM stand-in: bilinear logits[b,p,q] = <p_enc[b,p], q_enc[b,q]>
    s = jax.lax.dot_general(
        p_enc, q_enc,
        dimension_numbers=(((2,), (2,)), ((0,), (0,))),   # contract Dp, batch B
        preferred_element_type=jnp.float32)               # [B, Ppad, Qpad] f32
    logits_ref[...] = s                                   # lane-dense store

    # Fused argmax over the valid question positions (first index achieving
    # the max, matching torch.argmax tie-breaking). Padded columns masked out.
    q_iota = jax.lax.broadcasted_iota(jnp.int32, s.shape, 2)
    valid = q_iota < q_true
    s_m = jnp.where(valid, s, -jnp.inf)
    s_max = jnp.max(s_m, axis=2, keepdims=True)
    pred = jnp.min(jnp.where(jnp.logical_and(s_m >= s_max, valid),
                             q_iota, q_pad), axis=2)
    pred_ref[...] = pred.astype(jnp.int32)                # lane-dense store


def fused_match(p_ids, q_ids, fused_table, bias, *, batch, p_pad, q_pad,
                q_true):
    """p_ids: [B*Ppad,1] i32; q_ids: [B*Qpad,1] i32; fused_table: [V,Dp] bf16;
    bias: [1,Dp] f32.  Returns padded logits [B,Ppad,Qpad] f32 and padded
    predictions [B,Ppad] i32."""
    kernel = functools.partial(
        _fused_multitask_kernel,
        batch=batch, p_pad=p_pad, q_pad=q_pad, q_true=q_true)
    vmem_spec = pl.BlockSpec(memory_space=pltpu.MemorySpace.VMEM)
    return pl.pallas_call(
        kernel,
        out_shape=(jax.ShapeDtypeStruct((batch, p_pad, q_pad), jnp.float32),
                   jax.ShapeDtypeStruct((batch, p_pad), jnp.int32)),
        in_specs=[vmem_spec, vmem_spec, vmem_spec, vmem_spec],
        out_specs=(vmem_spec, vmem_spec),
        compiler_params=pltpu.CompilerParams(
            # explicit budget: safe on v5e/v6e (128 MiB) and v7x (64 MiB)
            vmem_limit_bytes=32 * 1024 * 1024),
    )(p_ids, q_ids, fused_table, bias)


# ----------------------------------------------------------------------------
# MultiTask forward (Pallas-backed)
# ----------------------------------------------------------------------------
class MultiTaskPallas:
    def __init__(self, hidden_size, embedding_dim, vocab_size, key):
        k0, k1, k2 = jax.random.split(key, 3)
        self.hidden_size = hidden_size
        self.embedding_dim = embedding_dim
        self.vocab_size = vocab_size

        # frozen pretrained embedding stand-in (deterministic init, no file IO)
        embedding = jax.random.normal(
            k0, (vocab_size, embedding_dim), jnp.float32) * 0.1
        # PreprocessLayer params (embedding_dim -> 2*hidden, BiLSTM-width out)
        w_pre = jax.random.normal(
            k1, (embedding_dim, 2 * hidden_size), jnp.float32) * 0.1
        b_pre = jax.random.normal(
            k2, (2 * hidden_size,), jnp.float32) * 0.1

        d_true = 2 * hidden_size
        d_pad = _round_up(max(d_true, LANES), LANES)
        self.d_true = d_true
        self.d_pad = d_pad

        # Fold the frozen embedding into the encoder weight once: [V, 2H].
        fused = embedding @ w_pre                              # exact (frozen)
        fused = jnp.pad(fused, ((0, 0), (0, d_pad - d_true)))  # lane-pad to 128
        # bf16 halves VMEM footprint of the resident table; the in-kernel
        # gather is still exact (one-hot MXU matmul), epilogue in f32.
        self.fused_table = fused.astype(jnp.bfloat16)          # [V, Dp]
        bias = jnp.pad(b_pre, (0, d_pad - d_true))
        self.bias = bias.reshape(1, d_pad).astype(jnp.float32)  # [1, Dp]
        # padded feature columns are exactly 0 (tanh(0+0)=0) -> bilinear dot
        # products are unchanged by the padding.
        # dropout is identity at inference time (eval mode).

        table_bytes = self.fused_table.size * 2
        assert table_bytes <= 8 * 1024 * 1024, (
            "TODO(synk): fused_table too large to keep resident in VMEM; "
            "switch to a manual DMA row-gather (pl.ANY + make_async_copy).")

    def forward(self, passage, question, answer=None,
                is_generation=False, is_classification=False):
        b, p_len = passage.shape
        assert question.shape == (b, MAX_QUESTION_LEN), (
            "question_rindex reversal requires question length == 30")
        # question.index_select(1, question_rindex) == reverse along seq axis
        question = question[:, ::-1]
        # TODO(synk): answer encoders only feed UnderstandPassage /
        # UnderstandQuestion, which are undefined external modules (flags
        # default to False), so the answer path is not ported.

        p_pad = _round_up(p_len, LANES)            # sublane+lane-dense outputs
        q_pad = _round_up(MAX_QUESTION_LEN, LANES)

        vmax = self.vocab_size - 1
        p_ids = jnp.clip(passage.astype(jnp.int32), 0, vmax)
        q_ids = jnp.clip(question.astype(jnp.int32), 0, vmax)
        p_ids = jnp.pad(p_ids, ((0, 0), (0, p_pad - p_len)))
        q_ids = jnp.pad(q_ids, ((0, 0), (0, q_pad - MAX_QUESTION_LEN)))
        p_ids = p_ids.reshape(b * p_pad, 1)
        q_ids = q_ids.reshape(b * q_pad, 1)

        logits_pad, preds_pad = fused_match(
            p_ids, q_ids, self.fused_table, self.bias,
            batch=b, p_pad=p_pad, q_pad=q_pad, q_true=MAX_QUESTION_LEN)

        match_logits = logits_pad[:, :p_len, :MAX_QUESTION_LEN]
        match_predictions = preds_pad[:, :p_len]

        # TODO(synk): UnderstandPassage (generation) and UnderstandQuestion
        # (classification) are undefined external modules; default flags in
        # the reference forward leave their outputs as None.
        return {
            'generation_logits': None,
            'generation_predictions': None,
            'classification_logits': None,
            'classification_predictions': None,
            'match_logits': match_logits,
            'match_predictions': match_predictions,
        }


if __name__ == "__main__":
    key = jax.random.PRNGKey(0)
    k_model, k_p, k_q = jax.random.split(key, 3)

    batch = 2
    passage_len = 16
    question_len = MAX_QUESTION_LEN   # reversal index requires seq len == 30
    vocab_size = 64
    embedding_dim = 32
    hidden_size = 32

    model = MultiTaskPallas(hidden_size, embedding_dim, vocab_size, k_model)

    passage = jax.random.randint(k_p, (batch, passage_len), 0, vocab_size,
                                 dtype=jnp.int32)
    question = jax.random.randint(k_q, (batch, question_len), 0, vocab_size,
                                  dtype=jnp.int32)

    out = model.forward(passage, question)
    jax.block_until_ready(out['match_logits'])
    jax.block_until_ready(out['match_predictions'])

    assert out['match_logits'].shape == (batch, passage_len, question_len)
    assert out['match_logits'].dtype == jnp.float32
    assert out['match_predictions'].shape == (batch, passage_len)
    assert bool(jnp.all(out['match_predictions'] >= 0))
    assert bool(jnp.all(out['match_predictions'] < question_len))

    # pure-JAX reference (same bf16 quantization points as the kernel)
    tab_f32 = model.fused_table.astype(jnp.float32)                 # [V, Dp]
    def ref_encode(ids):
        e = jnp.tanh(tab_f32[ids] + model.bias)                     # gather
        return e.astype(jnp.bfloat16).astype(jnp.float32)
    p_enc_ref = ref_encode(passage)                                 # [B,P,Dp]
    q_enc_ref = ref_encode(question[:, ::-1])                       # [B,Q,Dp]
    ref_logits = jnp.einsum('bpd,bqd->bpq', p_enc_ref, q_enc_ref)
    max_err = float(jnp.max(jnp.abs(ref_logits - out['match_logits'])))
    assert max_err < 2e-2, f"logits mismatch vs reference: {max_err}"

    print("KERNEL_OK")
</pallas_src>

<mosaic_0001>
module attributes {stable_mosaic.version = 11 : i64} {
  func.func @_fused_multitask_kernel(%arg0: memref<256x1xi32, #tpu.memory_space<vmem>>, %arg1: memref<256x1xi32, #tpu.memory_space<vmem>>, %arg2: memref<64x128xbf16, #tpu.memory_space<vmem>>, %arg3: memref<1x128xf32, #tpu.memory_space<vmem>>, %arg4: memref<2x128x128xf32, #tpu.memory_space<vmem>>, %arg5: memref<2x128xi32, #tpu.memory_space<vmem>>) attributes {dimension_semantics = [], scalar_prefetch = 0 : i64, scratch_operands = 0 : i64, tpu.core_type = #tpu.core_type<tc>} {
    %c0 = arith.constant 0 : index
    %c0_0 = arith.constant 0 : index
    %0 = vector.load %arg2[%c0, %c0_0] : memref<64x128xbf16, #tpu.memory_space<vmem>>, vector<64x128xbf16>
    %c0_1 = arith.constant 0 : index
    %c0_2 = arith.constant 0 : index
    %1 = vector.load %arg3[%c0_1, %c0_2] : memref<1x128xf32, #tpu.memory_space<vmem>>, vector<1x128xf32>
    %c0_3 = arith.constant 0 : index
    %c0_4 = arith.constant 0 : index
    %2 = vector.load %arg0[%c0_3, %c0_4] : memref<256x1xi32, #tpu.memory_space<vmem>>, vector<256x1xi32>
    %3 = tpu.iota {dimensions = array<i32: 1>} : vector<256x64xi32>
    %4 = vector.broadcast %2 : vector<256x1xi32> to vector<256x64xi32>
    %5 = arith.cmpi eq, %3, %4 : vector<256x64xi32>
    %6 = arith.extui %5 : vector<256x64xi1> to vector<256x64xi32>
    %7 = arith.sitofp %6 : vector<256x64xi32> to vector<256x64xf32>
    %8 = arith.truncf %7 : vector<256x64xf32> to vector<256x64xbf16>
    %cst = arith.constant dense<0.000000e+00> : vector<256x128xf32>
    %9 = tpu.matmul %8, %0, %cst {dimension_numbers = #tpu.dot_dimension_numbers<[1], [0], [0], [1], [0, 0, 1, 1], [], []>} : vector<256x64xbf16>, vector<64x128xbf16>, vector<256x128xf32> -> vector<256x128xf32>
    %10 = vector.broadcast %1 : vector<1x128xf32> to vector<256x128xf32>
    %11 = arith.addf %9, %10 : vector<256x128xf32>
    %12 = math.tanh %11 : vector<256x128xf32>
    %13 = arith.truncf %12 : vector<256x128xf32> to vector<256x128xbf16>
    %14 = vector.shape_cast %13 : vector<256x128xbf16> to vector<2x128x128xbf16>
    %c0_5 = arith.constant 0 : index
    %c0_6 = arith.constant 0 : index
    %15 = vector.load %arg1[%c0_5, %c0_6] : memref<256x1xi32, #tpu.memory_space<vmem>>, vector<256x1xi32>
    %16 = tpu.iota {dimensions = array<i32: 1>} : vector<256x64xi32>
    %17 = vector.broadcast %15 : vector<256x1xi32> to vector<256x64xi32>
    %18 = arith.cmpi eq, %16, %17 : vector<256x64xi32>
    %19 = arith.extui %18 : vector<256x64xi1> to vector<256x64xi32>
    %20 = arith.sitofp %19 : vector<256x64xi32> to vector<256x64xf32>
    %21 = arith.truncf %20 : vector<256x64xf32> to vector<256x64xbf16>
    %cst_7 = arith.constant dense<0.000000e+00> : vector<256x128xf32>
    %22 = tpu.matmul %21, %0, %cst_7 {dimension_numbers = #tpu.dot_dimension_numbers<[1], [0], [0], [1], [0, 0, 1, 1], [], []>} : vector<256x64xbf16>, vector<64x128xbf16>, vector<256x128xf32> -> vector<256x128xf32>
    %23 = vector.broadcast %1 : vector<1x128xf32> to vector<256x128xf32>
    %24 = arith.addf %22, %23 : vector<256x128xf32>
    %25 = math.tanh %24 : vector<256x128xf32>
    %26 = arith.truncf %25 : vector<256x128xf32> to vector<256x128xbf16>
    %27 = vector.shape_cast %26 : vector<256x128xbf16> to vector<2x128x128xbf16>
    %cst_8 = arith.constant dense<0.000000e+00> : vector<2x128x128xf32>
    %28 = tpu.matmul %14, %27, %cst_8 {dimension_numbers = #tpu.dot_dimension_numbers<[2], [2], [1], [1], [0, 0, 0, 1, 1, 1], [0], [0]>} : vector<2x128x128xbf16>, vector<2x128x128xbf16>, vector<2x128x128xf32> -> vector<2x128x128xf32>
    %c0_9 = arith.constant 0 : index
    %c0_10 = arith.constant 0 : index
    %c0_11 = arith.constant 0 : index
    %29 = vector.load %arg4[%c0_9, %c0_10, %c0_11] : memref<2x128x128xf32, #tpu.memory_space<vmem>>, vector<2x128x128xf32>
    tpu.vector_store %arg4[%c0_9, %c0_10, %c0_11], %28 {strides = array<i32>} : memref<2x128x128xf32, #tpu.memory_space<vmem>>, vector<2x128x128xf32>,
    %30 = tpu.iota {dimensions = array<i32: 2>} : vector<2x128x128xi32>
    %c30_i32 = arith.constant 30 : i32
    %31 = vector.broadcast %c30_i32 : i32 to vector<2x128x128xi32>
    %32 = arith.cmpi slt, %30, %31 : vector<2x128x128xi32>
    %cst_12 = arith.constant 0xFF800000 : f32
    %33 = vector.broadcast %cst_12 : f32 to vector<2x128x128xf32>
    %34 = arith.select %32, %28, %33 : vector<2x128x128xi1>, vector<2x128x128xf32>
    %cst_13 = arith.constant dense<0xFF800000> : vector<2x128xf32>
    %35 = vector.multi_reduction <maximumf>, %34, %cst_13 [2] : vector<2x128x128xf32> to vector<2x128xf32>
    %36 = vector.shape_cast %35 : vector<2x128xf32> to vector<2x128x1xf32>
    %37 = vector.broadcast %36 : vector<2x128x1xf32> to vector<2x128x128xf32>
    %38 = arith.cmpf oge, %34, %37 : vector<2x128x128xf32>
    %39 = arith.andi %38, %32 : vector<2x128x128xi1>
    %c128_i32 = arith.constant 128 : i32
    %40 = vector.broadcast %c128_i32 : i32 to vector<2x128x128xi32>
    %41 = arith.select %39, %30, %40 : vector<2x128x128xi1>, vector<2x128x128xi32>
    %cst_14 = arith.constant dense<2147483647> : vector<2x128xi32>
    %42 = vector.multi_reduction <minsi>, %41, %cst_14 [2] : vector<2x128x128xi32> to vector<2x128xi32>
    %c0_15 = arith.constant 0 : index
    %c0_16 = arith.constant 0 : index
    %43 = vector.load %arg5[%c0_15, %c0_16] : memref<2x128xi32, #tpu.memory_space<vmem>>, vector<2x128xi32>
    tpu.vector_store %arg5[%c0_15, %c0_16], %42 {strides = array<i32>} : memref<2x128xi32, #tpu.memory_space<vmem>>, vector<2x128xi32>,
    return
  }
}

</mosaic_0001>

<llo_original>
// kernel: tpu_custom_call.1
$region0: #{tpu_custom_call.1}
  #allocation0 [shape = 'u32[]', space=smem, size = 0x4, offset = 0x4, fixed_abs, tag = 'smem constant byte address 0x4 - core index']
  #allocation1 [shape = 'u32[144,128]{1,0:T(1,128)}', space=vmem, size = 0x12000, scoped, tag = 'internal scratch']
  %s0 = inlined_call_operand.vmem [shape: s32[256,1], index: 0, kind: input, shape index: {}]
  %s1 = inlined_call_operand.vmem [shape: s32[256,1], index: 1, kind: input, shape index: {}]
  %s2 = inlined_call_operand.vmem [shape: bf16[64,128], index: 2, kind: input, shape index: {}]
  %s3 = inlined_call_operand.vmem [shape: f32[1,128], index: 3, kind: input, shape index: {}]
  %s4 = inlined_call_operand.hbm [shape: f32[2,128,128], index: 4, kind: output, shape index: {0}]
  %s5 = inlined_call_operand.hbm [shape: s32[2,128], index: 5, kind: output, shape index: {1}]
  %6 = xla_tuple %s4, %s5
  %s7 = sld [smem:[#allocation0]]
  $region34: #{tpu_custom_call.1} parent=0
    _
  %s9 = ssub.s32 1, %s7
  %s10 = scalar_select 0, %s9, %s7
  $region1: #{tpu_custom_call.1} parent=0
    #allocation2 [shape = 'u8[131072]{0}', space=vmem, size = 0x20000, scoped, tag = 'output window, operand 0, single buffered']
    #allocation3 [shape = 's32[1]{0}', space=sflag, size = 0x4, scoped, tag = 'scoped memory for tpu_custom_call.1']
    #allocation4 [shape = 'u8[1024]{0}', space=vmem, size = 0x400, scoped, tag = 'output window, operand 1, single buffered']
    #allocation5 [shape = 's32[1]{0}', space=sflag, size = 0x4, scoped, tag = 'scoped memory for tpu_custom_call.1']
    %11 = vsyncpa [#allocation3], 0
    %12 = vsyncpa [#allocation5], 0
    // Predicated region
    $region2: #{tpu_custom_call.1} parent=1 // pred_check
      _
    $region3: #{tpu_custom_call.1} parent=1 // pred_check_branch
      %14 = sbr.rel (0) target = $region5
    $region4: #{tpu_custom_call.1} parent=1 // pred_region
      _
    $region5: #{tpu_custom_call.1} parent=1 // pred_fallthru
      _
    // Predicated region
    $region6: #{tpu_custom_call.1} parent=1 // pred_check
      _
    $region7: #{tpu_custom_call.1} parent=1 // pred_check_branch
      %16 = sbr.rel (0) target = $region9
    $region8: #{tpu_custom_call.1} parent=1 // pred_region
      _
    $region9: #{tpu_custom_call.1} parent=1 // pred_fallthru
      _
    // Predicated region
    $region10: #{tpu_custom_call.1} parent=1 // pred_check
      _
    $region11: #{tpu_custom_call.1} parent=1 // pred_check_branch
      %18 = sbr.rel (0) target = $region13
    $region12: #{tpu_custom_call.1} parent=1 // pred_region
      _
    $region13: #{tpu_custom_call.1} parent=1 // pred_fallthru
      _
    // Predicated region
    $region14: #{tpu_custom_call.1} parent=1 // pred_check
      _
    $region15: #{tpu_custom_call.1} parent=1 // pred_check_branch
      %20 = sbr.rel (0) target = $region17
    $region16: #{tpu_custom_call.1} parent=1 // pred_region
      _
    $region17: #{tpu_custom_call.1} parent=1 // pred_fallthru
      _
    %v22 = vld [vmem:[%s2] sm:$0xf]
    %v23 = vld [vmem:[%s2 + $0x4] sm:$0xf]
    %v24 = vld [vmem:[%s2 + $0x8] sm:$0xf]
    %v25 = vld [vmem:[%s2 + $0xc] sm:$0xf]
    %v26 = vld [vmem:[%s2 + $0x10] sm:$0xf]
    %v27 = vld [vmem:[%s2 + $0x14] sm:$0xf]
    %v28 = vld [vmem:[%s2 + $0x18] sm:$0xf]
    %v29 = vld [vmem:[%s2 + $0x1c] sm:$0xf]
    %v30 = vld [vmem:[%s3] sm:$0x1]
    %v31 = vld [vmem:[%s0] sm:$0xff]
    %v32 = vld [vmem:[%s0 + $0x8] sm:$0xff]
    %v33 = vld [vmem:[%s0 + $0x10] sm:$0xff]
    %v34 = vld [vmem:[%s0 + $0x18] sm:$0xff]
    %v35 = vld [vmem:[%s0 + $0x20] sm:$0xff]
    %v36 = vld [vmem:[%s0 + $0x28] sm:$0xff]
    %v37 = vld [vmem:[%s0 + $0x30] sm:$0xff]
    %v38 = vld [vmem:[%s0 + $0x38] sm:$0xff]
    %v39 = vld [vmem:[%s0 + $0x40] sm:$0xff]
    %v40 = vld [vmem:[%s0 + $0x48] sm:$0xff]
    %v41 = vld [vmem:[%s0 + $0x50] sm:$0xff]
    %v42 = vld [vmem:[%s0 + $0x58] sm:$0xff]
    %v43 = vld [vmem:[%s0 + $0x60] sm:$0xff]
    %v44 = vld [vmem:[%s0 + $0x68] sm:$0xff]
    %v45 = vld [vmem:[%s0 + $0x70] sm:$0xff]
    %v46 = vld [vmem:[%s0 + $0x78] sm:$0xff]
    %v47 = vld [vmem:[%s0 + $0x80] sm:$0xff]
    %v48 = vld [vmem:[%s0 + $0x88] sm:$0xff]
    %v49 = vld [vmem:[%s0 + $0x90] sm:$0xff]
    %v50 = vld [vmem:[%s0 + $0x98] sm:$0xff]
    %v51 = vld [vmem:[%s0 + $0xa0] sm:$0xff]
    %v52 = vld [vmem:[%s0 + $0xa8] sm:$0xff]
    %v53 = vld [vmem:[%s0 + $0xb0] sm:$0xff]
    %v54 = vld [vmem:[%s0 + $0xb8] sm:$0xff]
    %v55 = vld [vmem:[%s0 + $0xc0] sm:$0xff]
    %v56 = vld [vmem:[%s0 + $0xc8] sm:$0xff]
    %v57 = vld [vmem:[%s0 + $0xd0] sm:$0xff]
    %v58 = vld [vmem:[%s0 + $0xd8] sm:$0xff]
    %v59 = vld [vmem:[%s0 + $0xe0] sm:$0xff]
    %v60 = vld [vmem:[%s0 + $0xe8] sm:$0xff]
    %v61 = vld [vmem:[%s0 + $0xf0] sm:$0xff]
    %v62 = vld [vmem:[%s0 + $0xf8] sm:$0xff]
    %v63 = vlaneseq
    %v64 = vand.u32 %v63, 127
    %65 = vset.pattern.permute.xlu0 0
    %66 = vperm.xlu0 %65, %v31
    %v67 = vpop.permute.xlu0 %66
    %68 = vset.pattern.permute.xlu0 0
    %69 = vperm.xlu0 %68, %v32
    %v70 = vpop.permute.xlu0 %69
    %71 = vset.pattern.permute.xlu0 0
    %72 = vperm.xlu0 %71, %v33
    %v73 = vpop.permute.xlu0 %72
    %74 = vset.pattern.permute.xlu0 0
    %75 = vperm.xlu0 %74, %v34
    %v76 = vpop.permute.xlu0 %75
    %77 = vset.pattern.permute.xlu0 0
    %78 = vperm.xlu0 %77, %v35
    %v79 = vpop.permute.xlu0 %78
    %80 = vset.pattern.permute.xlu0 0
    %81 = vperm.xlu0 %80, %v36
    %v82 = vpop.permute.xlu0 %81
    %83 = vset.pattern.permute.xlu0 0
    %84 = vperm.xlu0 %83, %v37
    %v85 = vpop.permute.xlu0 %84
    %86 = vset.pattern.permute.xlu0 0
    %87 = vperm.xlu0 %86, %v38
    %v88 = vpop.permute.xlu0 %87
    %89 = vset.pattern.permute.xlu0 0
    %90 = vperm.xlu0 %89, %v39
    %v91 = vpop.permute.xlu0 %90
    %92 = vset.pattern.permute.xlu0 0
    %93 = vperm.xlu0 %92, %v40
    %v94 = vpop.permute.xlu0 %93
    %95 = vset.pattern.permute.xlu0 0
    %96 = vperm.xlu0 %95, %v41
    %v97 = vpop.permute.xlu0 %96
    %98 = vset.pattern.permute.xlu0 0
    %99 = vperm.xlu0 %98, %v42
    %v100 = vpop.permute.xlu0 %99
    %101 = vset.pattern.permute.xlu0 0
    %102 = vperm.xlu0 %101, %v43
    %v103 = vpop.permute.xlu0 %102
    %104 = vset.pattern.permute.xlu0 0
    %105 = vperm.xlu0 %104, %v44
    %v106 = vpop.permute.xlu0 %105
    %107 = vset.pattern.permute.xlu0 0
    %108 = vperm.xlu0 %107, %v45
    %v109 = vpop.permute.xlu0 %108
    %110 = vset.pattern.permute.xlu0 0
    %111 = vperm.xlu0 %110, %v46
    %v112 = vpop.permute.xlu0 %111
    %113 = vset.pattern.permute.xlu0 0
    %114 = vperm.xlu0 %113, %v47
    %v115 = vpop.permute.xlu0 %114
    %116 = vset.pattern.permute.xlu0 0
    %117 = vperm.xlu0 %116, %v48
    %v118 = vpop.permute.xlu0 %117
    %119 = vset.pattern.permute.xlu0 0
    %120 = vperm.xlu0 %119, %v49
    %v121 = vpop.permute.xlu0 %120
    %122 = vset.pattern.permute.xlu0 0
    %123 = vperm.xlu0 %122, %v50
    %v124 = vpop.permute.xlu0 %123
    %125 = vset.pattern.permute.xlu0 0
    %126 = vperm.xlu0 %125, %v51
    %v127 = vpop.permute.xlu0 %126
    %128 = vset.pattern.permute.xlu0 0
    %129 = vperm.xlu0 %128, %v52
    %v130 = vpop.permute.xlu0 %129
    %131 = vset.pattern.permute.xlu0 0
    %132 = vperm.xlu0 %131, %v53
    %v133 = vpop.permute.xlu0 %132
    %134 = vset.pattern.permute.xlu0 0
    %135 = vperm.xlu0 %134, %v54
    %v136 = vpop.permute.xlu0 %135
    %137 = vset.pattern.permute.xlu0 0
    %138 = vperm.xlu0 %137, %v55
    %v139 = vpop.permute.xlu0 %138
    %140 = vset.pattern.permute.xlu0 0
    %141 = vperm.xlu0 %140, %v56
    %v142 = vpop.permute.xlu0 %141
    %143 = vset.pattern.permute.xlu0 0
    %144 = vperm.xlu0 %143, %v57
    %v145 = vpop.permute.xlu0 %144
    %146 = vset.pattern.permute.xlu0 0
    %147 = vperm.xlu0 %146, %v58
    %v148 = vpop.permute.xlu0 %147
    %149 = vset.pattern.permute.xlu0 0
    %150 = vperm.xlu0 %149, %v59
    %v151 = vpop.permute.xlu0 %150
    %152 = vset.pattern.permute.xlu0 0
    %153 = vperm.xlu0 %152, %v60
    %v154 = vpop.permute.xlu0 %153
    %155 = vset.pattern.permute.xlu0 0
    %156 = vperm.xlu0 %155, %v61
    %v157 = vpop.permute.xlu0 %156
    %158 = vset.pattern.permute.xlu0 0
    %159 = vperm.xlu0 %158, %v62
    %v160 = vpop.permute.xlu0 %159
    %vm161 = vcmp.eq.s32.totalorder %v64, %v67
    %vm162 = vcmp.eq.s32.totalorder %v64, %v70
    %vm163 = vcmp.eq.s32.totalorder %v64, %v73
    %vm164 = vcmp.eq.s32.totalorder %v64, %v76
    %vm165 = vcmp.eq.s32.totalorder %v64, %v79
    %vm166 = vcmp.eq.s32.totalorder %v64, %v82
    %vm167 = vcmp.eq.s32.totalorder %v64, %v85
    %vm168 = vcmp.eq.s32.totalorder %v64, %v88
    %vm169 = vcmp.eq.s32.totalorder %v64, %v91
    %vm170 = vcmp.eq.s32.totalorder %v64, %v94
    %vm171 = vcmp.eq.s32.totalorder %v64, %v97
    %vm172 = vcmp.eq.s32.totalorder %v64, %v100
    %vm173 = vcmp.eq.s32.totalorder %v64, %v103
    %vm174 = vcmp.eq.s32.totalorder %v64, %v106
    %vm175 = vcmp.eq.s32.totalorder %v64, %v109
    %vm176 = vcmp.eq.s32.totalorder %v64, %v112
    %vm177 = vcmp.eq.s32.totalorder %v64, %v115
    %vm178 = vcmp.eq.s32.totalorder %v64, %v118
    %vm179 = vcmp.eq.s32.totalorder %v64, %v121
    %vm180 = vcmp.eq.s32.totalorder %v64, %v124
    %vm181 = vcmp.eq.s32.totalorder %v64, %v127
    %vm182 = vcmp.eq.s32.totalorder %v64, %v130
    %vm183 = vcmp.eq.s32.totalorder %v64, %v133
    %vm184 = vcmp.eq.s32.totalorder %v64, %v136
    %vm185 = vcmp.eq.s32.totalorder %v64, %v139
    %vm186 = vcmp.eq.s32.totalorder %v64, %v142
    %vm187 = vcmp.eq.s32.totalorder %v64, %v145
    %vm188 = vcmp.eq.s32.totalorder %v64, %v148
    %vm189 = vcmp.eq.s32.totalorder %v64, %v151
    %vm190 = vcmp.eq.s32.totalorder %v64, %v154
    %vm191 = vcmp.eq.s32.totalorder %v64, %v157
    %vm192 = vcmp.eq.s32.totalorder %v64, %v160
    %v193 = vsel %vm161, 1, 0
    %v194 = vsel %vm162, 1, 0
    %v195 = vsel %vm163, 1, 0
    %v196 = vsel %vm164, 1, 0
    %v197 = vsel %vm165, 1, 0
    %v198 = vsel %vm166, 1, 0
    %v199 = vsel %vm167, 1, 0
    %v200 = vsel %vm168, 1, 0
    %v201 = vsel %vm169, 1, 0
    %v202 = vsel %vm170, 1, 0
    %v203 = vsel %vm171, 1, 0
    %v204 = vsel %vm172, 1, 0
    %v205 = vsel %vm173, 1, 0
    %v206 = vsel %vm174, 1, 0
    %v207 = vsel %vm175, 1, 0
    %v208 = vsel %vm176, 1, 0
    %v209 = vsel %vm177, 1, 0
    %v210 = vsel %vm178, 1, 0
    %v211 = vsel %vm179, 1, 0
    %v212 = vsel %vm180, 1, 0
    %v213 = vsel %vm181, 1, 0
    %v214 = vsel %vm182, 1, 0
    %v215 = vsel %vm183, 1, 0
    %v216 = vsel %vm184, 1, 0
    %v217 = vsel %vm185, 1, 0
    %v218 = vsel %vm186, 1, 0
    %v219 = vsel %vm187, 1, 0
    %v220 = vsel %vm188, 1, 0
    %v221 = vsel %vm189, 1, 0
    %v222 = vsel %vm190, 1, 0
    %v223 = vsel %vm191, 1, 0
    %v224 = vsel %vm192, 1, 0
    %v225 = vcvt.s32.f32 %v193
    %v226 = vcvt.s32.f32 %v194
    %v227 = vcvt.s32.f32 %v195
    %v228 = vcvt.s32.f32 %v196
    %v229 = vcvt.s32.f32 %v197
    %v230 = vcvt.s32.f32 %v198
    %v231 = vcvt.s32.f32 %v199
    %v232 = vcvt.s32.f32 %v200
    %v233 = vcvt.s32.f32 %v201
    %v234 = vcvt.s32.f32 %v202
    %v235 = vcvt.s32.f32 %v203
    %v236 = vcvt.s32.f32 %v204
    %v237 = vcvt.s32.f32 %v205
    %v238 = vcvt.s32.f32 %v206
    %v239 = vcvt.s32.f32 %v207
    %v240 = vcvt.s32.f32 %v208
    %v241 = vcvt.s32.f32 %v209
    %v242 = vcvt.s32.f32 %v210
    %v243 = vcvt.s32.f32 %v211
    %v244 = vcvt.s32.f32 %v212
    %v245 = vcvt.s32.f32 %v213
    %v246 = vcvt.s32.f32 %v214
    %v247 = vcvt.s32.f32 %v215
    %v248 = vcvt.s32.f32 %v216
    %v249 = vcvt.s32.f32 %v217
    %v250 = vcvt.s32.f32 %v218
    %v251 = vcvt.s32.f32 %v219
    %v252 = vcvt.s32.f32 %v220
    %v253 = vcvt.s32.f32 %v221
    %v254 = vcvt.s32.f32 %v222
    %v255 = vcvt.s32.f32 %v223
    %v256 = vcvt.s32.f32 %v224
    %v257 = vpack.c.bf16 %v226, %v225
    %v258 = vpack.c.bf16 %v228, %v227
    %v259 = vpack.c.bf16 %v230, %v229
    %v260 = vpack.c.bf16 %v232, %v231
    %v261 = vpack.c.bf16 %v234, %v233
    %v262 = vpack.c.bf16 %v236, %v235
    %v263 = vpack.c.bf16 %v238, %v237
    %v264 = vpack.c.bf16 %v240, %v239
    %v265 = vpack.c.bf16 %v242, %v241
    %v266 = vpack.c.bf16 %v244, %v243
    %v267 = vpack.c.bf16 %v246, %v245
    %v268 = vpack.c.bf16 %v248, %v247
    %v269 = vpack.c.bf16 %v250, %v249
    %v270 = vpack.c.bf16 %v252, %v251
    %v271 = vpack.c.bf16 %v254, %v253
    %v272 = vpack.c.bf16 %v256, %v255
    %v274 = vlaneseq
    %v275 = vshrl.u32 %v274, 7
    %v276 = vsub.s32 0, %v275
    %v277 = vrot.slane %v30, %v276
    %v287 = vunpack.c.l.b16 %v22
    %v288 = vunpack.c.l.b16 %v23
    %v289 = vunpack.c.l.b16 %v24
    %v290 = vunpack.c.l.b16 %v25
    %v291 = vunpack.c.l.b16 %v26
    %v292 = vunpack.c.l.b16 %v27
    %v293 = vunpack.c.l.b16 %v28
    %v294 = vunpack.c.l.b16 %v29
    %v295 = vpack.c.b16 %v288, %v287
    %v296 = vpack.c.b16 %v290, %v289
    %v297 = vpack.c.b16 %v292, %v291
    %v298 = vpack.c.b16 %v294, %v293
    %vm303 = vcmask 523264
    %v305 = vsel %vm303, %v257, 0
    %v308 = vsel %vm303, %v258, 0
    %v311 = vsel %vm303, %v259, 0
    %v314 = vsel %vm303, %v260, 0
    %v317 = vsel %vm303, %v261, 0
    %v320 = vsel %vm303, %v262, 0
    %v323 = vsel %vm303, %v263, 0
    %v326 = vsel %vm303, %v264, 0
    %v329 = vsel %vm303, %v265, 0
    %v332 = vsel %vm303, %v266, 0
    %v335 = vsel %vm303, %v267, 0
    %v338 = vsel %vm303, %v268, 0
    %v341 = vsel %vm303, %v269, 0
    %v344 = vsel %vm303, %v270, 0
    %v347 = vsel %vm303, %v271, 0
    %v350 = vsel %vm303, %v272, 0
    %352 = vmatprep.subr.bf16.mxu0 0
    %353 = vmatpush1.bf16.msra.mxu0 %v295
    %354 = vmatprep.subr.bf16.mxu0 0
    %355 = vmatpush1.bf16.msra.mxu0 %v296
    %356 = vmatprep.subr.bf16.mxu0 0
    %357 = vmatpush1.bf16.msra.mxu0 %v297
    %358 = vmatprep.subr.bf16.mxu0 0
    %359 = vmatpush1.bf16.msra.mxu0 %v298
    %360 = vmatprep.subr.bf16.mxu0 0
    %361 = vmatpush1.bf16.msra.mxu0 0
    %362 = vmatprep.subr.bf16.mxu0 0
    %363 = vmatpush1.bf16.msra.mxu0 0
    %364 = vmatprep.subr.bf16.mxu0 0
    %365 = vmatpush1.bf16.msra.mxu0 0
    %366 = vmatprep.subr.bf16.mxu0 0
    %367 = vmatpush1.bf16.msra.mxu0 0
    %368 = vmatprep.subr.bf16.mxu0 0
    %369 = vmatpush1.bf16.msra.mxu0 0
    %370 = vmatprep.subr.bf16.mxu0 0
    %371 = vmatpush1.bf16.msra.mxu0 0
    %372 = vmatprep.subr.bf16.mxu0 0
    %373 = vmatpush1.bf16.msra.mxu0 0
    %374 = vmatprep.subr.bf16.mxu0 0
    %375 = vmatpush1.bf16.msra.mxu0 0
    %376 = vmatprep.subr.bf16.mxu0 0
    %377 = vmatpush1.bf16.msra.mxu0 0
    %378 = vmatprep.subr.bf16.mxu0 0
    %379 = vmatpush1.bf16.msra.mxu0 0
    %380 = vmatprep.subr.bf16.mxu0 0
    %381 = vmatpush1.bf16.msra.mxu0 0
    %382 = vmatprep.subr.bf16.mxu0 0
    %383 = vmatpush1.bf16.msra.mxu0 0
    %384 = vmatprep.mubr.bf16.mxu0 0
    %385 = vmatmul.mubr.bf16.gmra.mrb[0].mxu0 %v305
    %v386 = vpop.f32.mrb[0].mxu0
    %v387 = vadd.f32 %v277, %v386
    %v388 = vpop.f32.mrb[0].mxu0
    %v389 = vpop.f32.mrb[0].mxu0
    %v390 = vadd.f32 %v277, %v389
    %v391 = vpop.f32.mrb[0].mxu0
    %392 = vmatprep.mubr.bf16.mxu0 0
    %393 = vmatmul.mubr.bf16.gmra.mrb[0].mxu0 %v308
    %v394 = vpop.f32.mrb[0].mxu0
    %v395 = vadd.f32 %v277, %v394
    %v396 = vpop.f32.mrb[0].mxu0
    %v397 = vpop.f32.mrb[0].mxu0
    %v398 = vadd.f32 %v277, %v397
    %v399 = vpop.f32.mrb[0].mxu0
    %400 = vmatprep.mubr.bf16.mxu0 0
    %401 = vmatmul.mubr.bf16.gmra.mrb[0].mxu0 %v311
    %v402 = vpop.f32.mrb[0].mxu0
    %v403 = vadd.f32 %v277, %v402
    %v404 = vpop.f32.mrb[0].mxu0
    %v405 = vpop.f32.mrb[0].mxu0
    %v406 = vadd.f32 %v277, %v405
    %v407 = vpop.f32.mrb[0].mxu0
    %408 = vmatprep.mubr.bf16.mxu0 0
    %409 = vmatmul.mubr.bf16.gmra.mrb[0].mxu0 %v314
    %v410 = vpop.f32.mrb[0].mxu0
    %v411 = vadd.f32 %v277, %v410
    %v412 = vpop.f32.mrb[0].mxu0
    %v413 = vpop.f32.mrb[0].mxu0
    %v414 = vadd.f32 %v277, %v413
    %v415 = vpop.f32.mrb[0].mxu0
    %416 = vmatprep.mubr.bf16.mxu0 0
    %417 = vmatmul.mubr.bf16.gmra.mrb[0].mxu0 %v317
    %v418 = vpop.f32.mrb[0].mxu0
    %v419 = vadd.f32 %v277, %v418
    %v420 = vpop.f32.mrb[0].mxu0
    %v421 = vpop.f32.mrb[0].mxu0
    %v422 = vadd.f32 %v277, %v421
    %v423 = vpop.f32.mrb[0].mxu0
    %424 = vmatprep.mubr.bf16.mxu0 0
    %425 = vmatmul.mubr.bf16.gmra.mrb[0].mxu0 %v320
    %v426 = vpop.f32.mrb[0].mxu0
    %v427 = vadd.f32 %v277, %v426
    %v428 = vpop.f32.mrb[0].mxu0
    %v429 = vpop.f32.mrb[0].mxu0
    %v430 = vadd.f32 %v277, %v429
    %v431 = vpop.f32.mrb[0].mxu0
    %432 = vmatprep.mubr.bf16.mxu0 0
    %433 = vmatmul.mubr.bf16.gmra.mrb[0].mxu0 %v323
    %v434 = vpop.f32.mrb[0].mxu0
    %v435 = vadd.f32 %v277, %v434
    %v436 = vpop.f32.mrb[0].mxu0
    %v437 = vpop.f32.mrb[0].mxu0
    %v438 = vadd.f32 %v277, %v437
    %v439 = vpop.f32.mrb[0].mxu0
    %440 = vmatprep.mubr.bf16.mxu0 0
    %441 = vmatmul.mubr.bf16.gmra.mrb[0].mxu0 %v326
    %v442 = vpop.f32.mrb[0].mxu0
    %v443 = vadd.f32 %v277, %v442
    %v444 = vpop.f32.mrb[0].mxu0
    %v445 = vpop.f32.mrb[0].mxu0
    %v446 = vadd.f32 %v277, %v445
    %v447 = vpop.f32.mrb[0].mxu0
    %448 = vmatprep.mubr.bf16.mxu0 0
    %449 = vmatmul.mubr.bf16.gmra.mrb[0].mxu0 %v329
    %v450 = vpop.f32.mrb[0].mxu0
    %v451 = vadd.f32 %v277, %v450
    %v452 = vpop.f32.mrb[0].mxu0
    %v453 = vpop.f32.mrb[0].mxu0
    %v454 = vadd.f32 %v277, %v453
    %v455 = vpop.f32.mrb[0].mxu0
    %456 = vmatprep.mubr.bf16.mxu0 0
    %457 = vmatmul.mubr.bf16.gmra.mrb[0].mxu0 %v332
    %v458 = vpop.f32.mrb[0].mxu0
    %v459 = vadd.f32 %v277, %v458
    %v460 = vpop.f32.mrb[0].mxu0
    %v461 = vpop.f32.mrb[0].mxu0
    %v462 = vadd.f32 %v277, %v461
    %v463 = vpop.f32.mrb[0].mxu0
    %464 = vmatprep.mubr.bf16.mxu0 0
    %465 = vmatmul.mubr.bf16.gmra.mrb[0].mxu0 %v335
    %v466 = vpop.f32.mrb[0].mxu0
    %v467 = vadd.f32 %v277, %v466
    %v468 = vpop.f32.mrb[0].mxu0
    %v469 = vpop.f32.mrb[0].mxu0
    %v470 = vadd.f32 %v277, %v469
    %v471 = vpop.f32.mrb[0].mxu0
    %472 = vmatprep.mubr.bf16.mxu0 0
    %473 = vmatmul.mubr.bf16.gmra.mrb[0].mxu0 %v338
    %v474 = vpop.f32.mrb[0].mxu0
    %v475 = vadd.f32 %v277, %v474
    %v476 = vpop.f32.mrb[0].mxu0
    %v477 = vpop.f32.mrb[0].mxu0
    %v478 = vadd.f32 %v277, %v477
    %v479 = vpop.f32.mrb[0].mxu0
    %480 = vmatprep.mubr.bf16.mxu0 0
    %481 = vmatmul.mubr.bf16.gmra.mrb[0].mxu0 %v341
    %v482 = vpop.f32.mrb[0].mxu0
    %v483 = vadd.f32 %v277, %v482
    %v484 = vpop.f32.mrb[0].mxu0
    %v485 = vpop.f32.mrb[0].mxu0
    %v486 = vadd.f32 %v277, %v485
    %v487 = vpop.f32.mrb[0].mxu0
    %488 = vmatprep.mubr.bf16.mxu0 0
    %489 = vmatmul.mubr.bf16.gmra.mrb[0].mxu0 %v344
    %v490 = vpop.f32.mrb[0].mxu0
    %v491 = vadd.f32 %v277, %v490
    %v492 = vpop.f32.mrb[0].mxu0
    %v493 = vpop.f32.mrb[0].mxu0
    %v494 = vadd.f32 %v277, %v493
    %v495 = vpop.f32.mrb[0].mxu0
    %496 = vmatprep.mubr.bf16.mxu0 0
    %497 = vmatmul.mubr.bf16.gmra.mrb[0].mxu0 %v347
    %v498 = vpop.f32.mrb[0].mxu0
    %v499 = vadd.f32 %v277, %v498
    %v500 = vpop.f32.mrb[0].mxu0
    %v501 = vpop.f32.mrb[0].mxu0
    %v502 = vadd.f32 %v277, %v501
    %v503 = vpop.f32.mrb[0].mxu0
    %504 = vmatprep.mubr.bf16.mxu0 0
    %505 = vmatmul.mubr.bf16.gmra.mrb[0].mxu0 %v350
    %v506 = vpop.f32.mrb[0].mxu0
    %v507 = vadd.f32 %v277, %v506
    %v508 = vpop.f32.mrb[0].mxu0
    %v509 = vpop.f32.mrb[0].mxu0
    %v510 = vadd.f32 %v277, %v509
    %v511 = vpop.f32.mrb[0].mxu0
    %512 = vdwg.mxu0
    %v513 = vtanh.pop %v387
    %v514 = vtanh.pop %v390
    %v515 = vtanh.pop %v395
    %v516 = vtanh.pop %v398
    %v517 = vtanh.pop %v403
    %v518 = vtanh.pop %v406
    %v519 = vtanh.pop %v411
    %v520 = vtanh.pop %v414
    %v521 = vtanh.pop %v419
    %v522 = vtanh.pop %v422
    %v523 = vtanh.pop %v427
    %v524 = vtanh.pop %v430
    %v525 = vtanh.pop %v435
    %v526 = vtanh.pop %v438
    %v527 = vtanh.pop %v443
    %v528 = vtanh.pop %v446
    %v529 = vtanh.pop %v451
    %v530 = vtanh.pop %v454
    %v531 = vtanh.pop %v459
    %v532 = vtanh.pop %v462
    %v533 = vtanh.pop %v467
    %v534 = vtanh.pop %v470
    %v535 = vtanh.pop %v475
    %v536 = vtanh.pop %v478
    %v537 = vtanh.pop %v483
    %v538 = vtanh.pop %v486
    %v539 = vtanh.pop %v491
    %v540 = vtanh.pop %v494
    %v541 = vtanh.pop %v499
    %v542 = vtanh.pop %v502
    %v543 = vtanh.pop %v507
    %v544 = vtanh.pop %v510
    %v545 = vpack.c.bf16 %v514, %v513
    %v546 = vpack.c.bf16 %v516, %v515
    %v547 = vpack.c.bf16 %v518, %v517
    %v548 = vpack.c.bf16 %v520, %v519
    %v549 = vpack.c.bf16 %v522, %v521
    %v550 = vpack.c.bf16 %v524, %v523
    %v551 = vpack.c.bf16 %v526, %v525
    %v552 = vpack.c.bf16 %v528, %v527
    %v553 = vpack.c.bf16 %v530, %v529
    %v554 = vpack.c.bf16 %v532, %v531
    %v555 = vpack.c.bf16 %v534, %v533
    %v556 = vpack.c.bf16 %v536, %v535
    %v557 = vpack.c.bf16 %v538, %v537
    %v558 = vpack.c.bf16 %v540, %v539
    %v559 = vpack.c.bf16 %v542, %v541
    %v560 = vpack.c.bf16 %v544, %v543
    %v561 = vld [vmem:[%s1] sm:$0xff]
    %v562 = vld [vmem:[%s1 + $0x8] sm:$0xff]
    %v563 = vld [vmem:[%s1 + $0x10] sm:$0xff]
    %v564 = vld [vmem:[%s1 + $0x18] sm:$0xff]
    %v565 = vld [vmem:[%s1 + $0x20] sm:$0xff]
    %v566 = vld [vmem:[%s1 + $0x28] sm:$0xff]
    %v567 = vld [vmem:[%s1 + $0x30] sm:$0xff]
    %v568 = vld [vmem:[%s1 + $0x38] sm:$0xff]
    %v569 = vld [vmem:[%s1 + $0x40] sm:$0xff]
    %v570 = vld [vmem:[%s1 + $0x48] sm:$0xff]
    %v571 = vld [vmem:[%s1 + $0x50] sm:$0xff]
    %v572 = vld [vmem:[%s1 + $0x58] sm:$0xff]
    %v573 = vld [vmem:[%s1 + $0x60] sm:$0xff]
    %v574 = vld [vmem:[%s1 + $0x68] sm:$0xff]
    %v575 = vld [vmem:[%s1 + $0x70] sm:$0xff]
    %v576 = vld [vmem:[%s1 + $0x78] sm:$0xff]
    %v577 = vld [vmem:[%s1 + $0x80] sm:$0xff]
    %v578 = vld [vmem:[%s1 + $0x88] sm:$0xff]
    %v579 = vld [vmem:[%s1 + $0x90] sm:$0xff]
    %v580 = vld [vmem:[%s1 + $0x98] sm:$0xff]
    %v581 = vld [vmem:[%s1 + $0xa0] sm:$0xff]
    %v582 = vld [vmem:[%s1 + $0xa8] sm:$0xff]
    %v583 = vld [vmem:[%s1 + $0xb0] sm:$0xff]
    %v584 = vld [vmem:[%s1 + $0xb8] sm:$0xff]
    %v585 = vld [vmem:[%s1 + $0xc0] sm:$0xff]
    %v586 = vld [vmem:[%s1 + $0xc8] sm:$0xff]
    %v587 = vld [vmem:[%s1 + $0xd0] sm:$0xff]
    %v588 = vld [vmem:[%s1 + $0xd8] sm:$0xff]
    %v589 = vld [vmem:[%s1 + $0xe0] sm:$0xff]
    %v590 = vld [vmem:[%s1 + $0xe8] sm:$0xff]
    %v591 = vld [vmem:[%s1 + $0xf0] sm:$0xff]
    %v592 = vld [vmem:[%s1 + $0xf8] sm:$0xff]
    %593 = vset.pattern.permute.xlu0 0
    %594 = vperm.xlu0 %593, %v561
    %v595 = vpop.permute.xlu0 %594
    %596 = vset.pattern.permute.xlu0 0
    %597 = vperm.xlu0 %596, %v562
    %v598 = vpop.permute.xlu0 %597
    %599 = vset.pattern.permute.xlu0 0
    %600 = vperm.xlu0 %599, %v563
    %v601 = vpop.permute.xlu0 %600
    %602 = vset.pattern.permute.xlu0 0
    %603 = vperm.xlu0 %602, %v564
    %v604 = vpop.permute.xlu0 %603
    %605 = vset.pattern.permute.xlu0 0
    %606 = vperm.xlu0 %605, %v565
    %v607 = vpop.permute.xlu0 %606
    %608 = vset.pattern.permute.xlu0 0
    %609 = vperm.xlu0 %608, %v566
    %v610 = vpop.permute.xlu0 %609
    %611 = vset.pattern.permute.xlu0 0
    %612 = vperm.xlu0 %611, %v567
    %v613 = vpop.permute.xlu0 %612
    %614 = vset.pattern.permute.xlu0 0
    %615 = vperm.xlu0 %614, %v568
    %v616 = vpop.permute.xlu0 %615
    %617 = vset.pattern.permute.xlu0 0
    %618 = vperm.xlu0 %617, %v569
    %v619 = vpop.permute.xlu0 %618
    %620 = vset.pattern.permute.xlu0 0
    %621 = vperm.xlu0 %620, %v570
    %v622 = vpop.permute.xlu0 %621
    %623 = vset.pattern.permute.xlu0 0
    %624 = vperm.xlu0 %623, %v571
    %v625 = vpop.permute.xlu0 %624
    %626 = vset.pattern.permute.xlu0 0
    %627 = vperm.xlu0 %626, %v572
    %v628 = vpop.permute.xlu0 %627
    %629 = vset.pattern.permute.xlu0 0
    %630 = vperm.xlu0 %629, %v573
    %v631 = vpop.permute.xlu0 %630
    %632 = vset.pattern.permute.xlu0 0
    %633 = vperm.xlu0 %632, %v574
    %v634 = vpop.permute.xlu0 %633
    %635 = vset.pattern.permute.xlu0 0
    %636 = vperm.xlu0 %635, %v575
    %v637 = vpop.permute.xlu0 %636
    %638 = vset.pattern.permute.xlu0 0
    %639 = vperm.xlu0 %638, %v576
    %v640 = vpop.permute.xlu0 %639
    %641 = vset.pattern.permute.xlu0 0
    %642 = vperm.xlu0 %641, %v577
    %v643 = vpop.permute.xlu0 %642
    %644 = vset.pattern.permute.xlu0 0
    %645 = vperm.xlu0 %644, %v578
    %v646 = vpop.permute.xlu0 %645
    %647 = vset.pattern.permute.xlu0 0
    %648 = vperm.xlu0 %647, %v579
    %v649 = vpop.permute.xlu0 %648
    %650 = vset.pattern.permute.xlu0 0
    %651 = vperm.xlu0 %650, %v580
    %v652 = vpop.permute.xlu0 %651
    %653 = vset.pattern.permute.xlu0 0
    %654 = vperm.xlu0 %653, %v581
    %v655 = vpop.permute.xlu0 %654
    %656 = vset.pattern.permute.xlu0 0
    %657 = vperm.xlu0 %656, %v582
    %v658 = vpop.permute.xlu0 %657
    %659 = vset.pattern.permute.xlu0 0
    %660 = vperm.xlu0 %659, %v583
    %v661 = vpop.permute.xlu0 %660
    %662 = vset.pattern.permute.xlu0 0
    %663 = vperm.xlu0 %662, %v584
    %v664 = vpop.permute.xlu0 %663
    %665 = vset.pattern.permute.xlu0 0
    %666 = vperm.xlu0 %665, %v585
    %v667 = vpop.permute.xlu0 %666
    %668 = vset.pattern.permute.xlu0 0
    %669 = vperm.xlu0 %668, %v586
    %v670 = vpop.permute.xlu0 %669
    %671 = vset.pattern.permute.xlu0 0
    %672 = vperm.xlu0 %671, %v587
    %v673 = vpop.permute.xlu0 %672
    %674 = vset.pattern.permute.xlu0 0
    %675 = vperm.xlu0 %674, %v588
    %v676 = vpop.permute.xlu0 %675
    %677 = vset.pattern.permute.xlu0 0
    %678 = vperm.xlu0 %677, %v589
    %v679 = vpop.permute.xlu0 %678
    %680 = vset.pattern.permute.xlu0 0
    %681 = vperm.xlu0 %680, %v590
    %v682 = vpop.permute.xlu0 %681
    %683 = vset.pattern.permute.xlu0 0
    %684 = vperm.xlu0 %683, %v591
    %v685 = vpop.permute.xlu0 %684
    %686 = vset.pattern.permute.xlu0 0
    %687 = vperm.xlu0 %686, %v592
    %v688 = vpop.permute.xlu0 %687
    %vm689 = vcmp.eq.s32.totalorder %v64, %v595
    %vm690 = vcmp.eq.s32.totalorder %v64, %v598
    %vm691 = vcmp.eq.s32.totalorder %v64, %v601
    %vm692 = vcmp.eq.s32.totalorder %v64, %v604
    %vm693 = vcmp.eq.s32.totalorder %v64, %v607
    %vm694 = vcmp.eq.s32.totalorder %v64, %v610
    %vm695 = vcmp.eq.s32.totalorder %v64, %v613
    %vm696 = vcmp.eq.s32.totalorder %v64, %v616
    %vm697 = vcmp.eq.s32.totalorder %v64, %v619
    %vm698 = vcmp.eq.s32.totalorder %v64, %v622
    %vm699 = vcmp.eq.s32.totalorder %v64, %v625
    %vm700 = vcmp.eq.s32.totalorder %v64, %v628
    %vm701 = vcmp.eq.s32.totalorder %v64, %v631
    %vm702 = vcmp.eq.s32.totalorder %v64, %v634
    %vm703 = vcmp.eq.s32.totalorder %v64, %v637
    %vm704 = vcmp.eq.s32.totalorder %v64, %v640
    %vm705 = vcmp.eq.s32.totalorder %v64, %v643
    %vm706 = vcmp.eq.s32.totalorder %v64, %v646
    %vm707 = vcmp.eq.s32.totalorder %v64, %v649
    %vm708 = vcmp.eq.s32.totalorder %v64, %v652
    %vm709 = vcmp.eq.s32.totalorder %v64, %v655
    %vm710 = vcmp.eq.s32.totalorder %v64, %v658
    %vm711 = vcmp.eq.s32.totalorder %v64, %v661
    %vm712 = vcmp.eq.s32.totalorder %v64, %v664
    %vm713 = vcmp.eq.s32.totalorder %v64, %v667
    %vm714 = vcmp.eq.s32.totalorder %v64, %v670
    %vm715 = vcmp.eq.s32.totalorder %v64, %v673
    %vm716 = vcmp.eq.s32.totalorder %v64, %v676
    %vm717 = vcmp.eq.s32.totalorder %v64, %v679
    %vm718 = vcmp.eq.s32.totalorder %v64, %v682
    %vm719 = vcmp.eq.s32.totalorder %v64, %v685
    %vm720 = vcmp.eq.s32.totalorder %v64, %v688
    %v721 = vsel %vm689, 1, 0
    %v722 = vsel %vm690, 1, 0
    %v723 = vsel %vm691, 1, 0
    %v724 = vsel %vm692, 1, 0
    %v725 = vsel %vm693, 1, 0
    %v726 = vsel %vm694, 1, 0
    %v727 = vsel %vm695, 1, 0
    %v728 = vsel %vm696, 1, 0
    %v729 = vsel %vm697, 1, 0
    %v730 = vsel %vm698, 1, 0
    %v731 = vsel %vm699, 1, 0
    %v732 = vsel %vm700, 1, 0
    %v733 = vsel %vm701, 1, 0
    %v734 = vsel %vm702, 1, 0
    %v735 = vsel %vm703, 1, 0
    %v736 = vsel %vm704, 1, 0
    %v737 = vsel %vm705, 1, 0
    %v738 = vsel %vm706, 1, 0
    %v739 = vsel %vm707, 1, 0
    %v740 = vsel %vm708, 1, 0
    %v741 = vsel %vm709, 1, 0
    %v742 = vsel %vm710, 1, 0
    %v743 = vsel %vm711, 1, 0
    %v744 = vsel %vm712, 1, 0
    %v745 = vsel %vm713, 1, 0
    %v746 = vsel %vm714, 1, 0
    %v747 = vsel %vm715, 1, 0
    %v748 = vsel %vm716, 1, 0
    %v749 = vsel %vm717, 1, 0
    %v750 = vsel %vm718, 1, 0
    %v751 = vsel %vm719, 1, 0
    %v752 = vsel %vm720, 1, 0
    %v753 = vcvt.s32.f32 %v721
    %v754 = vcvt.s32.f32 %v722
    %v755 = vcvt.s32.f32 %v723
    %v756 = vcvt.s32.f32 %v724
    %v757 = vcvt.s32.f32 %v725
    %v758 = vcvt.s32.f32 %v726
    %v759 = vcvt.s32.f32 %v727
    %v760 = vcvt.s32.f32 %v728
    %v761 = vcvt.s32.f32 %v729
    %v762 = vcvt.s32.f32 %v730
    %v763 = vcvt.s32.f32 %v731
    %v764 = vcvt.s32.f32 %v732
    %v765 = vcvt.s32.f32 %v733
    %v766 = vcvt.s32.f32 %v734
    %v767 = vcvt.s32.f32 %v735
    %v768 = vcvt.s32.f32 %v736
    %v769 = vcvt.s32.f32 %v737
    %v770 = vcvt.s32.f32 %v738
    %v771 = vcvt.s32.f32 %v739
    %v772 = vcvt.s32.f32 %v740
    %v773 = vcvt.s32.f32 %v741
    %v774 = vcvt.s32.f32 %v742
    %v775 = vcvt.s32.f32 %v743
    %v776 = vcvt.s32.f32 %v744
    %v777 = vcvt.s32.f32 %v745
    %v778 = vcvt.s32.f32 %v746
    %v779 = vcvt.s32.f32 %v747
    %v780 = vcvt.s32.f32 %v748
    %v781 = vcvt.s32.f32 %v749
    %v782 = vcvt.s32.f32 %v750
    %v783 = vcvt.s32.f32 %v751
    %v784 = vcvt.s32.f32 %v752
    %v785 = vpack.c.bf16 %v754, %v753
    %v786 = vpack.c.bf16 %v756, %v755
    %v787 = vpack.c.bf16 %v758, %v757
    %v788 = vpack.c.bf16 %v760, %v759
    %v789 = vpack.c.bf16 %v762, %v761
    %v790 = vpack.c.bf16 %v764, %v763
    %v791 = vpack.c.bf16 %v766, %v765
    %v792 = vpack.c.bf16 %v768, %v767
    %v793 = vpack.c.bf16 %v770, %v769
    %v794 = vpack.c.bf16 %v772, %v771
    %v795 = vpack.c.bf16 %v774, %v773
    %v796 = vpack.c.bf16 %v776, %v775
    %v797 = vpack.c.bf16 %v778, %v777
    %v798 = vpack.c.bf16 %v780, %v779
    %v799 = vpack.c.bf16 %v782, %v781
    %v800 = vpack.c.bf16 %v784, %v783
    %v802 = vsel %vm303, %v785, 0
    %v805 = vsel %vm303, %v786, 0
    %v808 = vsel %vm303, %v787, 0
    %v811 = vsel %vm303, %v788, 0
    %v814 = vsel %vm303, %v789, 0
    %v817 = vsel %vm303, %v790, 0
    %v820 = vsel %vm303, %v791, 0
    %v823 = vsel %vm303, %v792, 0
    %v826 = vsel %vm303, %v793, 0
    %v829 = vsel %vm303, %v794, 0
    %v832 = vsel %vm303, %v795, 0
    %v835 = vsel %vm303, %v796, 0
    %v838 = vsel %vm303, %v797, 0
    %v841 = vsel %vm303, %v798, 0
    %v844 = vsel %vm303, %v799, 0
    %v847 = vsel %vm303, %v800, 0
    %849 = vmatprep.subr.bf16.mxu0 0
    %850 = vmatpush1.bf16.msra.mxu0 %v295
    %851 = vmatprep.subr.bf16.mxu0 0
    %852 = vmatpush1.bf16.msra.mxu0 %v296
    %853 = vmatprep.subr.bf16.mxu0 0
    %854 = vmatpush1.bf16.msra.mxu0 %v297
    %855 = vmatprep.subr.bf16.mxu0 0
    %856 = vmatpush1.bf16.msra.mxu0 %v298
    %857 = vmatprep.subr.bf16.mxu0 0
    %858 = vmatpush1.bf16.msra.mxu0 0
    %859 = vmatprep.subr.bf16.mxu0 0
    %860 = vmatpush1.bf16.msra.mxu0 0
    %861 = vmatprep.subr.bf16.mxu0 0
    %862 = vmatpush1.bf16.msra.mxu0 0
    %863 = vmatprep.subr.bf16.mxu0 0
    %864 = vmatpush1.bf16.msra.mxu0 0
    %865 = vmatprep.subr.bf16.mxu0 0
    %866 = vmatpush1.bf16.msra.mxu0 0
    %867 = vmatprep.subr.bf16.mxu0 0
    %868 = vmatpush1.bf16.msra.mxu0 0
    %869 = vmatprep.subr.bf16.mxu0 0
    %870 = vmatpush1.bf16.msra.mxu0 0
    %871 = vmatprep.subr.bf16.mxu0 0
    %872 = vmatpush1.bf16.msra.mxu0 0
    %873 = vmatprep.subr.bf16.mxu0 0
    %874 = vmatpush1.bf16.msra.mxu0 0
    %875 = vmatprep.subr.bf16.mxu0 0
    %876 = vmatpush1.bf16.msra.mxu0 0
    %877 = vmatprep.subr.bf16.mxu0 0
    %878 = vmatpush1.bf16.msra.mxu0 0
    %879 = vmatprep.subr.bf16.mxu0 0
    %880 = vmatpush1.bf16.msra.mxu0 0
    %881 = vmatprep.mubr.bf16.mxu0 0
    %882 = vmatmul.mubr.bf16.gmra.mrb[0].mxu0 %v802
    %v883 = vpop.f32.mrb[0].mxu0
    %v884 = vadd.f32 %v277, %v883
    %v885 = vpop.f32.mrb[0].mxu0
    %v886 = vpop.f32.mrb[0].mxu0
    %v887 = vadd.f32 %v277, %v886
    %v888 = vpop.f32.mrb[0].mxu0
    %889 = vmatprep.mubr.bf16.mxu0 0
    %890 = vmatmul.mubr.bf16.gmra.mrb[0].mxu0 %v805
    %v891 = vpop.f32.mrb[0].mxu0
    %v892 = vadd.f32 %v277, %v891
    %v893 = vpop.f32.mrb[0].mxu0
    %v894 = vpop.f32.mrb[0].mxu0
    %v895 = vadd.f32 %v277, %v894
    %v896 = vpop.f32.mrb[0].mxu0
    %897 = vmatprep.mubr.bf16.mxu0 0
    %898 = vmatmul.mubr.bf16.gmra.mrb[0].mxu0 %v808
    %v899 = vpop.f32.mrb[0].mxu0
    %v900 = vadd.f32 %v277, %v899
    %v901 = vpop.f32.mrb[0].mxu0
    %v902 = vpop.f32.mrb[0].mxu0
    %v903 = vadd.f32 %v277, %v902
    %v904 = vpop.f32.mrb[0].mxu0
    %905 = vmatprep.mubr.bf16.mxu0 0
    %906 = vmatmul.mubr.bf16.gmra.mrb[0].mxu0 %v811
    %v907 = vpop.f32.mrb[0].mxu0
    %v908 = vadd.f32 %v277, %v907
    %v909 = vpop.f32.mrb[0].mxu0
    %v910 = vpop.f32.mrb[0].mxu0
    %v911 = vadd.f32 %v277, %v910
    %v912 = vpop.f32.mrb[0].mxu0
    %913 = vmatprep.mubr.bf16.mxu0 0
    %914 = vmatmul.mubr.bf16.gmra.mrb[0].mxu0 %v814
    %v915 = vpop.f32.mrb[0].mxu0
    %v916 = vadd.f32 %v277, %v915
    %v917 = vpop.f32.mrb[0].mxu0
    %v918 = vpop.f32.mrb[0].mxu0
    %v919 = vadd.f32 %v277, %v918
    %v920 = vpop.f32.mrb[0].mxu0
    %921 = vmatprep.mubr.bf16.mxu0 0
    %922 = vmatmul.mubr.bf16.gmra.mrb[0].mxu0 %v817
    %v923 = vpop.f32.mrb[0].mxu0
    %v924 = vadd.f32 %v277, %v923
    %v925 = vpop.f32.mrb[0].mxu0
    %v926 = vpop.f32.mrb[0].mxu0
    %v927 = vadd.f32 %v277, %v926
    %v928 = vpop.f32.mrb[0].mxu0
    %929 = vmatprep.mubr.bf16.mxu0 0
    %930 = vmatmul.mubr.bf16.gmra.mrb[0].mxu0 %v820
    %v931 = vpop.f32.mrb[0].mxu0
    %v932 = vadd.f32 %v277, %v931
    %v933 = vpop.f32.mrb[0].mxu0
    %v934 = vpop.f32.mrb[0].mxu0
    %v935 = vadd.f32 %v277, %v934
    %v936 = vpop.f32.mrb[0].mxu0
    %937 = vmatprep.mubr.bf16.mxu0 0
    %938 = vmatmul.mubr.bf16.gmra.mrb[0].mxu0 %v823
    %v939 = vpop.f32.mrb[0].mxu0
    %v940 = vadd.f32 %v277, %v939
    %v941 = vpop.f32.mrb[0].mxu0
    %v942 = vpop.f32.mrb[0].mxu0
    %v943 = vadd.f32 %v277, %v942
    %v944 = vpop.f32.mrb[0].mxu0
    %945 = vmatprep.mubr.bf16.mxu0 0
    %946 = vmatmul.mubr.bf16.gmra.mrb[0].mxu0 %v826
    %v947 = vpop.f32.mrb[0].mxu0
    %v948 = vadd.f32 %v277, %v947
    %v949 = vpop.f32.mrb[0].mxu0
    %v950 = vpop.f32.mrb[0].mxu0
    %v951 = vadd.f32 %v277, %v950
    %v952 = vpop.f32.mrb[0].mxu0
    %953 = vmatprep.mubr.bf16.mxu0 0
    %954 = vmatmul.mubr.bf16.gmra.mrb[0].mxu0 %v829
    %v955 = vpop.f32.mrb[0].mxu0
    %v956 = vadd.f32 %v277, %v955
    %v957 = vpop.f32.mrb[0].mxu0
    %v958 = vpop.f32.mrb[0].mxu0
    %v959 = vadd.f32 %v277, %v958
    %v960 = vpop.f32.mrb[0].mxu0
    %961 = vmatprep.mubr.bf16.mxu0 0
    %962 = vmatmul.mubr.bf16.gmra.mrb[0].mxu0 %v832
    %v963 = vpop.f32.mrb[0].mxu0
    %v964 = vadd.f32 %v277, %v963
    %v965 = vpop.f32.mrb[0].mxu0
    %v966 = vpop.f32.mrb[0].mxu0
    %v967 = vadd.f32 %v277, %v966
    %v968 = vpop.f32.mrb[0].mxu0
    %969 = vmatprep.mubr.bf16.mxu0 0
    %970 = vmatmul.mubr.bf16.gmra.mrb[0].mxu0 %v835
    %v971 = vpop.f32.mrb[0].mxu0
    %v972 = vadd.f32 %v277, %v971
    %v973 = vpop.f32.mrb[0].mxu0
    %v974 = vpop.f32.mrb[0].mxu0
    %v975 = vadd.f32 %v277, %v974
    %v976 = vpop.f32.mrb[0].mxu0
    %977 = vmatprep.mubr.bf16.mxu0 0
    %978 = vmatmul.mubr.bf16.gmra.mrb[0].mxu0 %v838
    %v979 = vpop.f32.mrb[0].mxu0
    %v980 = vadd.f32 %v277, %v979
    %v981 = vpop.f32.mrb[0].mxu0
    %v982 = vpop.f32.mrb[0].mxu0
    %v983 = vadd.f32 %v277, %v982
    %v984 = vpop.f32.mrb[0].mxu0
    %985 = vmatprep.mubr.bf16.mxu0 0
    %986 = vmatmul.mubr.bf16.gmra.mrb[0].mxu0 %v841
    %v987 = vpop.f32.mrb[0].mxu0
    %v988 = vadd.f32 %v277, %v987
    %v989 = vpop.f32.mrb[0].mxu0
    %v990 = vpop.f32.mrb[0].mxu0
    %v991 = vadd.f32 %v277, %v990
    %v992 = vpop.f32.mrb[0].mxu0
    %993 = vmatprep.mubr.bf16.mxu0 0
    %994 = vmatmul.mubr.bf16.gmra.mrb[0].mxu0 %v844
    %v995 = vpop.f32.mrb[0].mxu0
    %v996 = vadd.f32 %v277, %v995
    %v997 = vpop.f32.mrb[0].mxu0
    %v998 = vpop.f32.mrb[0].mxu0
    %v999 = vadd.f32 %v277, %v998
    %v1000 = vpop.f32.mrb[0].mxu0
    %1001 = vmatprep.mubr.bf16.mxu0 0
    %1002 = vmatmul.mubr.bf16.gmra.mrb[0].mxu0 %v847
    %v1003 = vpop.f32.mrb[0].mxu0
    %v1004 = vadd.f32 %v277, %v1003
    %v1005 = vpop.f32.mrb[0].mxu0
    %v1006 = vpop.f32.mrb[0].mxu0
    %v1007 = vadd.f32 %v277, %v1006
    %v1008 = vpop.f32.mrb[0].mxu0
    %1009 = vdwg.mxu0
    %v1010 = vtanh.pop %v884
    %v1011 = vtanh.pop %v887
    %v1012 = vtanh.pop %v892
    %v1013 = vtanh.pop %v895
    %v1014 = vtanh.pop %v900
    %v1015 = vtanh.pop %v903
    %v1016 = vtanh.pop %v908
    %v1017 = vtanh.pop %v911
    %v1018 = vtanh.pop %v916
    %v1019 = vtanh.pop %v919
    %v1020 = vtanh.pop %v924
    %v1021 = vtanh.pop %v927
    %v1022 = vtanh.pop %v932
    %v1023 = vtanh.pop %v935
    %v1024 = vtanh.pop %v940
    %v1025 = vtanh.pop %v943
    %v1026 = vtanh.pop %v948
    %v1027 = vtanh.pop %v951
    %v1028 = vtanh.pop %v956
    %v1029 = vtanh.pop %v959
    %v1030 = vtanh.pop %v964
    %v1031 = vtanh.pop %v967
    %v1032 = vtanh.pop %v972
    %v1033 = vtanh.pop %v975
    %v1034 = vtanh.pop %v980
    %v1035 = vtanh.pop %v983
    %v1036 = vtanh.pop %v988
    %v1037 = vtanh.pop %v991
    %v1038 = vtanh.pop %v996
    %v1039 = vtanh.pop %v999
    %v1040 = vtanh.pop %v1004
    %v1041 = vtanh.pop %v1007
    %v1042 = vpack.c.bf16 %v1011, %v1010
    %v1043 = vpack.c.bf16 %v1013, %v1012
    %v1044 = vpack.c.bf16 %v1015, %v1014
    %v1045 = vpack.c.bf16 %v1017, %v1016
    %v1046 = vpack.c.bf16 %v1019, %v1018
    %v1047 = vpack.c.bf16 %v1021, %v1020
    %v1048 = vpack.c.bf16 %v1023, %v1022
    %v1049 = vpack.c.bf16 %v1025, %v1024
    %v1050 = vpack.c.bf16 %v1027, %v1026
    %v1051 = vpack.c.bf16 %v1029, %v1028
    %v1052 = vpack.c.bf16 %v1031, %v1030
    %v1053 = vpack.c.bf16 %v1033, %v1032
    %v1054 = vpack.c.bf16 %v1035, %v1034
    %v1055 = vpack.c.bf16 %v1037, %v1036
    %v1056 = vpack.c.bf16 %v1039, %v1038
    %v1057 = vpack.c.bf16 %v1041, %v1040
    %1058 = vmatprep.subr.bf16.mxu0 0
    %1059 = vmatpush1.bf16.xpose.msra.mxu0 %v1042
    %1060 = vmatprep.subr.bf16.mxu0 0
    %1061 = vmatpush1.bf16.xpose.msra.mxu0 %v1043
    %1062 = vmatprep.subr.bf16.mxu0 0
    %1063 = vmatpush1.bf16.xpose.msra.mxu0 %v1044
    %1064 = vmatprep.subr.bf16.mxu0 0
    %1065 = vmatpush1.bf16.xpose.msra.mxu0 %v1045
    %1066 = vmatprep.subr.bf16.mxu0 0
    %1067 = vmatpush1.bf16.xpose.msra.mxu0 %v1046
    %1068 = vmatprep.subr.bf16.mxu0 0
    %1069 = vmatpush1.bf16.xpose.msra.mxu0 %v1047
    %1070 = vmatprep.subr.bf16.mxu0 0
    %1071 = vmatpush1.bf16.xpose.msra.mxu0 %v1048
    %1072 = vmatprep.subr.bf16.mxu0 0
    %1073 = vmatpush1.bf16.xpose.msra.mxu0 %v1049
    %1074 = vmatprep.subr.bf16.mxu0 0
    %1075 = vmatpush1.bf16.xpose.msra.mxu0 0
    %1076 = vmatprep.subr.bf16.mxu0 0
    %1077 = vmatpush1.bf16.xpose.msra.mxu0 0
    %1078 = vmatprep.subr.bf16.mxu0 0
    %1079 = vmatpush1.bf16.xpose.msra.mxu0 0
    %1080 = vmatprep.subr.bf16.mxu0 0
    %1081 = vmatpush1.bf16.xpose.msra.mxu0 0
    %1082 = vmatprep.subr.bf16.mxu0 0
    %1083 = vmatpush1.bf16.xpose.msra.mxu0 0
    %1084 = vmatprep.subr.bf16.mxu0 0
    %1085 = vmatpush1.bf16.xpose.msra.mxu0 0
    %1086 = vmatprep.subr.bf16.mxu0 0
    %1087 = vmatpush1.bf16.xpose.msra.mxu0 0
    %1088 = vmatprep.subr.bf16.mxu0 0
    %1089 = vmatpush1.bf16.xpose.msra.mxu0 0
    %1090 = vmatprep.mubr.bf16.mxu0 0
    %1091 = vmatmul.mubr.bf16.gmra.mrb[0].mxu0 %v545
    %v1092 = vpop.f32.mrb[0].mxu0
    %v1093 = vadd.f32 0.0, %v1092
    %v1094 = vpop.f32.mrb[0].mxu0
    %v1095 = vpop.f32.mrb[0].mxu0
    %v1096 = vadd.f32 0.0, %v1095
    %v1097 = vpop.f32.mrb[0].mxu0
    %1098 = vmatprep.mubr.bf16.mxu0 0
    %1099 = vmatmul.mubr.bf16.gmra.mrb[0].mxu0 %v546
    %v1100 = vpop.f32.mrb[0].mxu0
    %v1101 = vadd.f32 0.0, %v1100
    %v1102 = vpop.f32.mrb[0].mxu0
    %v1103 = vpop.f32.mrb[0].mxu0
    %v1104 = vadd.f32 0.0, %v1103
    %v1105 = vpop.f32.mrb[0].mxu0
    %1106 = vmatprep.mubr.bf16.mxu0 0
    %1107 = vmatmul.mubr.bf16.gmra.mrb[0].mxu0 %v547
    %v1108 = vpop.f32.mrb[0].mxu0
    %v1109 = vadd.f32 0.0, %v1108
    %v1110 = vpop.f32.mrb[0].mxu0
    %v1111 = vpop.f32.mrb[0].mxu0
    %v1112 = vadd.f32 0.0, %v1111
    %v1113 = vpop.f32.mrb[0].mxu0
    %1114 = vmatprep.mubr.bf16.mxu0 0
    %1115 = vmatmul.mubr.bf16.gmra.mrb[0].mxu0 %v548
    %v1116 = vpop.f32.mrb[0].mxu0
    %v1117 = vadd.f32 0.0, %v1116
    %v1118 = vpop.f32.mrb[0].mxu0
    %v1119 = vpop.f32.mrb[0].mxu0
    %v1120 = vadd.f32 0.0, %v1119
    %v1121 = vpop.f32.mrb[0].mxu0
    %1122 = vmatprep.mubr.bf16.mxu0 0
    %1123 = vmatmul.mubr.bf16.gmra.mrb[0].mxu0 %v549
    %v1124 = vpop.f32.mrb[0].mxu0
    %v1125 = vadd.f32 0.0, %v1124
    %v1126 = vpop.f32.mrb[0].mxu0
    %v1127 = vpop.f32.mrb[0].mxu0
    %v1128 = vadd.f32 0.0, %v1127
    %v1129 = vpop.f32.mrb[0].mxu0
    %1130 = vmatprep.mubr.bf16.mxu0 0
    %1131 = vmatmul.mubr.bf16.gmra.mrb[0].mxu0 %v550
    %v1132 = vpop.f32.mrb[0].mxu0
    %v1133 = vadd.f32 0.0, %v1132
    %v1134 = vpop.f32.mrb[0].mxu0
    %v1135 = vpop.f32.mrb[0].mxu0
    %v1136 = vadd.f32 0.0, %v1135
    %v1137 = vpop.f32.mrb[0].mxu0
    %1138 = vmatprep.mubr.bf16.mxu0 0
    %1139 = vmatmul.mubr.bf16.gmra.mrb[0].mxu0 %v551
    %v1140 = vpop.f32.mrb[0].mxu0
    %v1141 = vadd.f32 0.0, %v1140
    %v1142 = vpop.f32.mrb[0].mxu0
    %v1143 = vpop.f32.mrb[0].mxu0
    %v1144 = vadd.f32 0.0, %v1143
    %v1145 = vpop.f32.mrb[0].mxu0
    %1146 = vmatprep.mubr.bf16.mxu0 0
    %1147 = vmatmul.mubr.bf16.gmra.mrb[0].mxu0 %v552
    %v1148 = vpop.f32.mrb[0].mxu0
    %v1149 = vadd.f32 0.0, %v1148
    %v1150 = vpop.f32.mrb[0].mxu0
    %v1151 = vpop.f32.mrb[0].mxu0
    %v1152 = vadd.f32 0.0, %v1151
    %v1153 = vpop.f32.mrb[0].mxu0
    %1154 = vdwg.mxu0
    %1155 = vmatprep.subr.bf16.mxu0 0
    %1156 = vmatpush1.bf16.xpose.msra.mxu0 %v1050
    %1157 = vmatprep.subr.bf16.mxu0 0
    %1158 = vmatpush1.bf16.xpose.msra.mxu0 %v1051
    %1159 = vmatprep.subr.bf16.mxu0 0
    %1160 = vmatpush1.bf16.xpose.msra.mxu0 %v1052
    %1161 = vmatprep.subr.bf16.mxu0 0
    %1162 = vmatpush1.bf16.xpose.msra.mxu0 %v1053
    %1163 = vmatprep.subr.bf16.mxu0 0
    %1164 = vmatpush1.bf16.xpose.msra.mxu0 %v1054
    %1165 = vmatprep.subr.bf16.mxu0 0
    %1166 = vmatpush1.bf16.xpose.msra.mxu0 %v1055
    %1167 = vmatprep.subr.bf16.mxu0 0
    %1168 = vmatpush1.bf16.xpose.msra.mxu0 %v1056
    %1169 = vmatprep.subr.bf16.mxu0 0
    %1170 = vmatpush1.bf16.xpose.msra.mxu0 %v1057
    %1171 = vmatprep.subr.bf16.mxu0 0
    %1172 = vmatpush1.bf16.xpose.msra.mxu0 0
    %1173 = vmatprep.subr.bf16.mxu0 0
    %1174 = vmatpush1.bf16.xpose.msra.mxu0 0
    %1175 = vmatprep.subr.bf16.mxu0 0
    %1176 = vmatpush1.bf16.xpose.msra.mxu0 0
    %1177 = vmatprep.subr.bf16.mxu0 0
    %1178 = vmatpush1.bf16.xpose.msra.mxu0 0
    %1179 = vmatprep.subr.bf16.mxu0 0
    %1180 = vmatpush1.bf16.xpose.msra.mxu0 0
    %1181 = vmatprep.subr.bf16.mxu0 0
    %1182 = vmatpush1.bf16.xpose.msra.mxu0 0
    %1183 = vmatprep.subr.bf16.mxu0 0
    %1184 = vmatpush1.bf16.xpose.msra.mxu0 0
    %1185 = vmatprep.subr.bf16.mxu0 0
    %1186 = vmatpush1.bf16.xpose.msra.mxu0 0
    %1187 = vmatprep.mubr.bf16.mxu0 0
    %1188 = vmatmul.mubr.bf16.gmra.mrb[0].mxu0 %v553
    %v1189 = vpop.f32.mrb[0].mxu0
    %v1190 = vadd.f32 0.0, %v1189
    %v1191 = vpop.f32.mrb[0].mxu0
    %v1192 = vpop.f32.mrb[0].mxu0
    %v1193 = vadd.f32 0.0, %v1192
    %v1194 = vpop.f32.mrb[0].mxu0
    %1195 = vmatprep.mubr.bf16.mxu0 0
    %1196 = vmatmul.mubr.bf16.gmra.mrb[0].mxu0 %v554
    %v1197 = vpop.f32.mrb[0].mxu0
    %v1198 = vadd.f32 0.0, %v1197
    %v1199 = vpop.f32.mrb[0].mxu0
    %v1200 = vpop.f32.mrb[0].mxu0
    %v1201 = vadd.f32 0.0, %v1200
    %v1202 = vpop.f32.mrb[0].mxu0
    %1203 = vmatprep.mubr.bf16.mxu0 0
    %1204 = vmatmul.mubr.bf16.gmra.mrb[0].mxu0 %v555
    %v1205 = vpop.f32.mrb[0].mxu0
    %v1206 = vadd.f32 0.0, %v1205
    %v1207 = vpop.f32.mrb[0].mxu0
    %v1208 = vpop.f32.mrb[0].mxu0
    %v1209 = vadd.f32 0.0, %v1208
    %v1210 = vpop.f32.mrb[0].mxu0
    %1211 = vmatprep.mubr.bf16.mxu0 0
    %1212 = vmatmul.mubr.bf16.gmra.mrb[0].mxu0 %v556
    %v1213 = vpop.f32.mrb[0].mxu0
    %v1214 = vadd.f32 0.0, %v1213
    %v1215 = vpop.f32.mrb[0].mxu0
    %v1216 = vpop.f32.mrb[0].mxu0
    %v1217 = vadd.f32 0.0, %v1216
    %v1218 = vpop.f32.mrb[0].mxu0
    %1219 = vmatprep.mubr.bf16.mxu0 0
    %1220 = vmatmul.mubr.bf16.gmra.mrb[0].mxu0 %v557
    %v1221 = vpop.f32.mrb[0].mxu0
    %v1222 = vadd.f32 0.0, %v1221
    %v1223 = vpop.f32.mrb[0].mxu0
    %v1224 = vpop.f32.mrb[0].mxu0
    %v1225 = vadd.f32 0.0, %v1224
    %v1226 = vpop.f32.mrb[0].mxu0
    %1227 = vmatprep.mubr.bf16.mxu0 0
    %1228 = vmatmul.mubr.bf16.gmra.mrb[0].mxu0 %v558
    %v1229 = vpop.f32.mrb[0].mxu0
    %v1230 = vadd.f32 0.0, %v1229
    %v1231 = vpop.f32.mrb[0].mxu0
    %v1232 = vpop.f32.mrb[0].mxu0
    %v1233 = vadd.f32 0.0, %v1232
    %v1234 = vpop.f32.mrb[0].mxu0
    %1235 = vmatprep.mubr.bf16.mxu0 0
    %1236 = vmatmul.mubr.bf16.gmra.mrb[0].mxu0 %v559
    %v1237 = vpop.f32.mrb[0].mxu0
    %v1238 = vadd.f32 0.0, %v1237
    %v1239 = vpop.f32.mrb[0].mxu0
    %v1240 = vpop.f32.mrb[0].mxu0
    %v1241 = vadd.f32 0.0, %v1240
    %v1242 = vpop.f32.mrb[0].mxu0
    %1243 = vmatprep.mubr.bf16.mxu0 0
    %1244 = vmatmul.mubr.bf16.gmra.mrb[0].mxu0 %v560
    %v1245 = vpop.f32.mrb[0].mxu0
    %v1246 = vadd.f32 0.0, %v1245
    %v1247 = vpop.f32.mrb[0].mxu0
    %v1248 = vpop.f32.mrb[0].mxu0
    %v1249 = vadd.f32 0.0, %v1248
    %v1250 = vpop.f32.mrb[0].mxu0
    %1251 = vdwg.mxu0
    %1252 = vst [vmem:[#allocation2] sm:$0xff] %v1093
    %1253 = vst [vmem:[#allocation2 + $0x8] sm:$0xff] %v1096
    %1254 = vst [vmem:[#allocation2 + $0x10] sm:$0xff] %v1101
    %1255 = vst [vmem:[#allocation2 + $0x18] sm:$0xff] %v1104
    %1256 = vst [vmem:[#allocation2 + $0x20] sm:$0xff] %v1109
    %1257 = vst [vmem:[#allocation2 + $0x28] sm:$0xff] %v1112
    %1258 = vst [vmem:[#allocation2 + $0x30] sm:$0xff] %v1117
    %1259 = vst [vmem:[#allocation2 + $0x38] sm:$0xff] %v1120
    %1260 = vst [vmem:[#allocation2 + $0x40] sm:$0xff] %v1125
    %1261 = vst [vmem:[#allocation2 + $0x48] sm:$0xff] %v1128
    %1262 = vst [vmem:[#allocation2 + $0x50] sm:$0xff] %v1133
    %1263 = vst [vmem:[#allocation2 + $0x58] sm:$0xff] %v1136
    %1264 = vst [vmem:[#allocation2 + $0x60] sm:$0xff] %v1141
    %1265 = vst [vmem:[#allocation2 + $0x68] sm:$0xff] %v1144
    %1266 = vst [vmem:[#allocation2 + $0x70] sm:$0xff] %v1149
    %1267 = vst [vmem:[#allocation2 + $0x78] sm:$0xff] %v1152
    %1268 = vst [vmem:[#allocation2 + $0x80] sm:$0xff] %v1190
    %1269 = vst [vmem:[#allocation2 + $0x88] sm:$0xff] %v1193
    %1270 = vst [vmem:[#allocation2 + $0x90] sm:$0xff] %v1198
    %1271 = vst [vmem:[#allocation2 + $0x98] sm:$0xff] %v1201
    %1272 = vst [vmem:[#allocation2 + $0xa0] sm:$0xff] %v1206
    %1273 = vst [vmem:[#allocation2 + $0xa8] sm:$0xff] %v1209
    %1274 = vst [vmem:[#allocation2 + $0xb0] sm:$0xff] %v1214
    %1275 = vst [vmem:[#allocation2 + $0xb8] sm:$0xff] %v1217
    %1276 = vst [vmem:[#allocation2 + $0xc0] sm:$0xff] %v1222
    %1277 = vst [vmem:[#allocation2 + $0xc8] sm:$0xff] %v1225
    %1278 = vst [vmem:[#allocation2 + $0xd0] sm:$0xff] %v1230
    %1279 = vst [vmem:[#allocation2 + $0xd8] sm:$0xff] %v1233
    %1280 = vst [vmem:[#allocation2 + $0xe0] sm:$0xff] %v1238
    %1281 = vst [vmem:[#allocation2 + $0xe8] sm:$0xff] %v1241
    %1282 = vst [vmem:[#allocation2 + $0xf0] sm:$0xff] %v1246
    %1283 = vst [vmem:[#allocation2 + $0xf8] sm:$0xff] %v1249
    %vm1284 = vcmp.lt.s32.totalorder %v64, 30
    %v1285 = vsel %vm1284, %v1093, -inf
    %v1286 = vsel %vm1284, %v1096, -inf
    %v1287 = vsel %vm1284, %v1101, -inf
    %v1288 = vsel %vm1284, %v1104, -inf
    %v1289 = vsel %vm1284, %v1109, -inf
    %v1290 = vsel %vm1284, %v1112, -inf
    %v1291 = vsel %vm1284, %v1117, -inf
    %v1292 = vsel %vm1284, %v1120, -inf
    %v1293 = vsel %vm1284, %v1125, -inf
    %v1294 = vsel %vm1284, %v1128, -inf
    %v1295 = vsel %vm1284, %v1133, -inf
    %v1296 = vsel %vm1284, %v1136, -inf
    %v1297 = vsel %vm1284, %v1141, -inf
    %v1298 = vsel %vm1284, %v1144, -inf
    %v1299 = vsel %vm1284, %v1149, -inf
    %v1300 = vsel %vm1284, %v1152, -inf
    %v1301 = vsel %vm1284, %v1190, -inf
    %v1302 = vsel %vm1284, %v1193, -inf
    %v1303 = vsel %vm1284, %v1198, -inf
    %v1304 = vsel %vm1284, %v1201, -inf
    %v1305 = vsel %vm1284, %v1206, -inf
    %v1306 = vsel %vm1284, %v1209, -inf
    %v1307 = vsel %vm1284, %v1214, -inf
    %v1308 = vsel %vm1284, %v1217, -inf
    %v1309 = vsel %vm1284, %v1222, -inf
    %v1310 = vsel %vm1284, %v1225, -inf
    %v1311 = vsel %vm1284, %v1230, -inf
    %v1312 = vsel %vm1284, %v1233, -inf
    %v1313 = vsel %vm1284, %v1238, -inf
    %v1314 = vsel %vm1284, %v1241, -inf
    %v1315 = vsel %vm1284, %v1246, -inf
    %v1316 = vsel %vm1284, %v1249, -inf
    %1317 = vmax.xlane.f32.xlu0 %v1285
    %v1318 = vpop.xlane.xlu0 %1317
    %1319 = vmax.xlane.f32.xlu0 %v1286
    %v1320 = vpop.xlane.xlu0 %1319
    %1321 = vmax.xlane.f32.xlu0 %v1287
    %v1322 = vpop.xlane.xlu0 %1321
    %1323 = vmax.xlane.f32.xlu0 %v1288
    %v1324 = vpop.xlane.xlu0 %1323
    %1325 = vmax.xlane.f32.xlu0 %v1289
    %v1326 = vpop.xlane.xlu0 %1325
    %1327 = vmax.xlane.f32.xlu0 %v1290
    %v1328 = vpop.xlane.xlu0 %1327
    %1329 = vmax.xlane.f32.xlu0 %v1291
    %v1330 = vpop.xlane.xlu0 %1329
    %1331 = vmax.xlane.f32.xlu0 %v1292
    %v1332 = vpop.xlane.xlu0 %1331
    %1333 = vmax.xlane.f32.xlu0 %v1293
    %v1334 = vpop.xlane.xlu0 %1333
    %1335 = vmax.xlane.f32.xlu0 %v1294
    %v1336 = vpop.xlane.xlu0 %1335
    %1337 = vmax.xlane.f32.xlu0 %v1295
    %v1338 = vpop.xlane.xlu0 %1337
    %1339 = vmax.xlane.f32.xlu0 %v1296
    %v1340 = vpop.xlane.xlu0 %1339
    %1341 = vmax.xlane.f32.xlu0 %v1297
    %v1342 = vpop.xlane.xlu0 %1341
    %1343 = vmax.xlane.f32.xlu0 %v1298
    %v1344 = vpop.xlane.xlu0 %1343
    %1345 = vmax.xlane.f32.xlu0 %v1299
    %v1346 = vpop.xlane.xlu0 %1345
    %1347 = vmax.xlane.f32.xlu0 %v1300
    %v1348 = vpop.xlane.xlu0 %1347
    %1349 = vmax.xlane.f32.xlu0 %v1301
    %v1350 = vpop.xlane.xlu0 %1349
    %1351 = vmax.xlane.f32.xlu0 %v1302
    %v1352 = vpop.xlane.xlu0 %1351
    %1353 = vmax.xlane.f32.xlu0 %v1303
    %v1354 = vpop.xlane.xlu0 %1353
    %1355 = vmax.xlane.f32.xlu0 %v1304
    %v1356 = vpop.xlane.xlu0 %1355
    %1357 = vmax.xlane.f32.xlu0 %v1305
    %v1358 = vpop.xlane.xlu0 %1357
    %1359 = vmax.xlane.f32.xlu0 %v1306
    %v1360 = vpop.xlane.xlu0 %1359
    %1361 = vmax.xlane.f32.xlu0 %v1307
    %v1362 = vpop.xlane.xlu0 %1361
    %1363 = vmax.xlane.f32.xlu0 %v1308
    %v1364 = vpop.xlane.xlu0 %1363
    %1365 = vmax.xlane.f32.xlu0 %v1309
    %v1366 = vpop.xlane.xlu0 %1365
    %1367 = vmax.xlane.f32.xlu0 %v1310
    %v1368 = vpop.xlane.xlu0 %1367
    %1369 = vmax.xlane.f32.xlu0 %v1311
    %v1370 = vpop.xlane.xlu0 %1369
    %1371 = vmax.xlane.f32.xlu0 %v1312
    %v1372 = vpop.xlane.xlu0 %1371
    %1373 = vmax.xlane.f32.xlu0 %v1313
    %v1374 = vpop.xlane.xlu0 %1373
    %1375 = vmax.xlane.f32.xlu0 %v1314
    %v1376 = vpop.xlane.xlu0 %1375
    %1377 = vmax.xlane.f32.xlu0 %v1315
    %v1378 = vpop.xlane.xlu0 %1377
    %1379 = vmax.xlane.f32.xlu0 %v1316
    %v1380 = vpop.xlane.xlu0 %1379
    %vm1381 = vcmp.ge.f32.partialorder %v1285, %v1318
    %vm1382 = vcmp.ge.f32.partialorder %v1286, %v1320
    %vm1383 = vcmp.ge.f32.partialorder %v1287, %v1322
    %vm1384 = vcmp.ge.f32.partialorder %v1288, %v1324
    %vm1385 = vcmp.ge.f32.partialorder %v1289, %v1326
    %vm1386 = vcmp.ge.f32.partialorder %v1290, %v1328
    %vm1387 = vcmp.ge.f32.partialorder %v1291, %v1330
    %vm1388 = vcmp.ge.f32.partialorder %v1292, %v1332
    %vm1389 = vcmp.ge.f32.partialorder %v1293, %v1334
    %vm1390 = vcmp.ge.f32.partialorder %v1294, %v1336
    %vm1391 = vcmp.ge.f32.partialorder %v1295, %v1338
    %vm1392 = vcmp.ge.f32.partialorder %v1296, %v1340
    %vm1393 = vcmp.ge.f32.partialorder %v1297, %v1342
    %vm1394 = vcmp.ge.f32.partialorder %v1298, %v1344
    %vm1395 = vcmp.ge.f32.partialorder %v1299, %v1346
    %vm1396 = vcmp.ge.f32.partialorder %v1300, %v1348
    %vm1397 = vcmp.ge.f32.partialorder %v1301, %v1350
    %vm1398 = vcmp.ge.f32.partialorder %v1302, %v1352
    %vm1399 = vcmp.ge.f32.partialorder %v1303, %v1354
    %vm1400 = vcmp.ge.f32.partialorder %v1304, %v1356
    %vm1401 = vcmp.ge.f32.partialorder %v1305, %v1358
    %vm1402 = vcmp.ge.f32.partialorder %v1306, %v1360
    %vm1403 = vcmp.ge.f32.partialorder %v1307, %v1362
    %vm1404 = vcmp.ge.f32.partialorder %v1308, %v1364
    %vm1405 = vcmp.ge.f32.partialorder %v1309, %v1366
    %vm1406 = vcmp.ge.f32.partialorder %v1310, %v1368
    %vm1407 = vcmp.ge.f32.partialorder %v1311, %v1370
    %vm1408 = vcmp.ge.f32.partialorder %v1312, %v1372
    %vm1409 = vcmp.ge.f32.partialorder %v1313, %v1374
    %vm1410 = vcmp.ge.f32.partialorder %v1314, %v1376
    %vm1411 = vcmp.ge.f32.partialorder %v1315, %v1378
    %vm1412 = vcmp.ge.f32.partialorder %v1316, %v1380
    %vm1413 = vmand %vm1381, %vm1284
    %vm1414 = vmand %vm1382, %vm1284
    %vm1415 = vmand %vm1383, %vm1284
    %vm1416 = vmand %vm1384, %vm1284
    %vm1417 = vmand %vm1385, %vm1284
    %vm1418 = vmand %vm1386, %vm1284
    %vm1419 = vmand %vm1387, %vm1284
    %vm1420 = vmand %vm1388, %vm1284
    %vm1421 = vmand %vm1389, %vm1284
    %vm1422 = vmand %vm1390, %vm1284
    %vm1423 = vmand %vm1391, %vm1284
    %vm1424 = vmand %vm1392, %vm1284
    %vm1425 = vmand %vm1393, %vm1284
    %vm1426 = vmand %vm1394, %vm1284
    %vm1427 = vmand %vm1395, %vm1284
    %vm1428 = vmand %vm1396, %vm1284
    %vm1429 = vmand %vm1397, %vm1284
    %vm1430 = vmand %vm1398, %vm1284
    %vm1431 = vmand %vm1399, %vm1284
    %vm1432 = vmand %vm1400, %vm1284
    %vm1433 = vmand %vm1401, %vm1284
    %vm1434 = vmand %vm1402, %vm1284
    %vm1435 = vmand %vm1403, %vm1284
    %vm1436 = vmand %vm1404, %vm1284
    %vm1437 = vmand %vm1405, %vm1284
    %vm1438 = vmand %vm1406, %vm1284
    %vm1439 = vmand %vm1407, %vm1284
    %vm1440 = vmand %vm1408, %vm1284
    %vm1441 = vmand %vm1409, %vm1284
    %vm1442 = vmand %vm1410, %vm1284
    %vm1443 = vmand %vm1411, %vm1284
    %vm1444 = vmand %vm1412, %vm1284
    %v1445 = vsel %vm1413, %v64, 128
    %v1446 = vsel %vm1414, %v64, 128
    %v1447 = vsel %vm1415, %v64, 128
    %v1448 = vsel %vm1416, %v64, 128
    %v1449 = vsel %vm1417, %v64, 128
    %v1450 = vsel %vm1418, %v64, 128
    %v1451 = vsel %vm1419, %v64, 128
    %v1452 = vsel %vm1420, %v64, 128
    %v1453 = vsel %vm1421, %v64, 128
    %v1454 = vsel %vm1422, %v64, 128
    %v1455 = vsel %vm1423, %v64, 128
    %v1456 = vsel %vm1424, %v64, 128
    %v1457 = vsel %vm1425, %v64, 128
    %v1458 = vsel %vm1426, %v64, 128
    %v1459 = vsel %vm1427, %v64, 128
    %v1460 = vsel %vm1428, %v64, 128
    %v1461 = vsel %vm1429, %v64, 128
    %v1462 = vsel %vm1430, %v64, 128
    %v1463 = vsel %vm1431, %v64, 128
    %v1464 = vsel %vm1432, %v64, 128
    %v1465 = vsel %vm1433, %v64, 128
    %v1466 = vsel %vm1434, %v64, 128
    %v1467 = vsel %vm1435, %v64, 128
    %v1468 = vsel %vm1436, %v64, 128
    %v1469 = vsel %vm1437, %v64, 128
    %v1470 = vsel %vm1438, %v64, 128
    %v1471 = vsel %vm1439, %v64, 128
    %v1472 = vsel %vm1440, %v64, 128
    %v1473 = vsel %vm1441, %v64, 128
    %v1474 = vsel %vm1442, %v64, 128
    %v1475 = vsel %vm1443, %v64, 128
    %v1476 = vsel %vm1444, %v64, 128
    %v1477 = vand.u32 %v1445, 65535
    %v1478 = vshra.s32 %v1445, 16
    %v1479 = vcvt.s32.f32 %v1477
    %v1480 = vcvt.s32.f32 %v1478
    %1481 = vmin.xlane.f32.xlu0 %v1480
    %v1482 = vpop.xlane.xlu0 %1481
    %vm1483 = vcmp.eq.f32.partialorder %v1480, %v1482
    %v1484 = vsel %vm1483, %v1479, inf
    %1485 = vmin.xlane.f32.xlu0 %v1484
    %v1486 = vpop.xlane.xlu0 %1485
    %v1487 = vcvt.f32.s32 %v1486
    %v1488 = vcvt.f32.s32 %v1482
    %v1489 = vshll.u32 %v1488, 16
    %v1490 = vadd.s32 %v1489, %v1487
    %v1491 = vand.u32 %v1446, 65535
    %v1492 = vshra.s32 %v1446, 16
    %v1493 = vcvt.s32.f32 %v1491
    %v1494 = vcvt.s32.f32 %v1492
    %1495 = vmin.xlane.f32.xlu0 %v1494
    %v1496 = vpop.xlane.xlu0 %1495
    %vm1497 = vcmp.eq.f32.partialorder %v1494, %v1496
    %v1498 = vsel %vm1497, %v1493, inf
    %1499 = vmin.xlane.f32.xlu0 %v1498
    %v1500 = vpop.xlane.xlu0 %1499
    %v1501 = vcvt.f32.s32 %v1500
    %v1502 = vcvt.f32.s32 %v1496
    %v1503 = vshll.u32 %v1502, 16
    %v1504 = vadd.s32 %v1503, %v1501
    %v1505 = vand.u32 %v1447, 65535
    %v1506 = vshra.s32 %v1447, 16
    %v1507 = vcvt.s32.f32 %v1505
    %v1508 = vcvt.s32.f32 %v1506
    %1509 = vmin.xlane.f32.xlu0 %v1508
    %v1510 = vpop.xlane.xlu0 %1509
    %vm1511 = vcmp.eq.f32.partialorder %v1508, %v1510
    %v1512 = vsel %vm1511, %v1507, inf
    %1513 = vmin.xlane.f32.xlu0 %v1512
    %v1514 = vpop.xlane.xlu0 %1513
    %v1515 = vcvt.f32.s32 %v1514
    %v1516 = vcvt.f32.s32 %v1510
    %v1517 = vshll.u32 %v1516, 16
    %v1518 = vadd.s32 %v1517, %v1515
    %v1519 = vand.u32 %v1448, 65535
    %v1520 = vshra.s32 %v1448, 16
    %v1521 = vcvt.s32.f32 %v1519
    %v1522 = vcvt.s32.f32 %v1520
    %1523 = vmin.xlane.f32.xlu0 %v1522
    %v1524 = vpop.xlane.xlu0 %1523
    %vm1525 = vcmp.eq.f32.partialorder %v1522, %v1524
    %v1526 = vsel %vm1525, %v1521, inf
    %1527 = vmin.xlane.f32.xlu0 %v1526
    %v1528 = vpop.xlane.xlu0 %1527
    %v1529 = vcvt.f32.s32 %v1528
    %v1530 = vcvt.f32.s32 %v1524
    %v1531 = vshll.u32 %v1530, 16
    %v1532 = vadd.s32 %v1531, %v1529
    %v1533 = vand.u32 %v1449, 65535
    %v1534 = vshra.s32 %v1449, 16
    %v1535 = vcvt.s32.f32 %v1533
    %v1536 = vcvt.s32.f32 %v1534
    %1537 = vmin.xlane.f32.xlu0 %v1536
    %v1538 = vpop.xlane.xlu0 %1537
    %vm1539 = vcmp.eq.f32.partialorder %v1536, %v1538
    %v1540 = vsel %vm1539, %v1535, inf
    %1541 = vmin.xlane.f32.xlu0 %v1540
    %v1542 = vpop.xlane.xlu0 %1541
    %v1543 = vcvt.f32.s32 %v1542
    %v1544 = vcvt.f32.s32 %v1538
    %v1545 = vshll.u32 %v1544, 16
    %v1546 = vadd.s32 %v1545, %v1543
    %v1547 = vand.u32 %v1450, 65535
    %v1548 = vshra.s32 %v1450, 16
    %v1549 = vcvt.s32.f32 %v1547
    %v1550 = vcvt.s32.f32 %v1548
    %1551 = vmin.xlane.f32.xlu0 %v1550
    %v1552 = vpop.xlane.xlu0 %1551
    %vm1553 = vcmp.eq.f32.partialorder %v1550, %v1552
    %v1554 = vsel %vm1553, %v1549, inf
    %1555 = vmin.xlane.f32.xlu0 %v1554
    %v1556 = vpop.xlane.xlu0 %1555
    %v1557 = vcvt.f32.s32 %v1556
    %v1558 = vcvt.f32.s32 %v1552
    %v1559 = vshll.u32 %v1558, 16
    %v1560 = vadd.s32 %v1559, %v1557
    %v1561 = vand.u32 %v1451, 65535
    %v1562 = vshra.s32 %v1451, 16
    %v1563 = vcvt.s32.f32 %v1561
    %v1564 = vcvt.s32.f32 %v1562
    %1565 = vmin.xlane.f32.xlu0 %v1564
    %v1566 = vpop.xlane.xlu0 %1565
    %vm1567 = vcmp.eq.f32.partialorder %v1564, %v1566
    %v1568 = vsel %vm1567, %v1563, inf
    %1569 = vmin.xlane.f32.xlu0 %v1568
    %v1570 = vpop.xlane.xlu0 %1569
    %v1571 = vcvt.f32.s32 %v1570
    %v1572 = vcvt.f32.s32 %v1566
    %v1573 = vshll.u32 %v1572, 16
    %v1574 = vadd.s32 %v1573, %v1571
    %v1575 = vand.u32 %v1452, 65535
    %v1576 = vshra.s32 %v1452, 16
    %v1577 = vcvt.s32.f32 %v1575
    %v1578 = vcvt.s32.f32 %v1576
    %1579 = vmin.xlane.f32.xlu0 %v1578
    %v1580 = vpop.xlane.xlu0 %1579
    %vm1581 = vcmp.eq.f32.partialorder %v1578, %v1580
    %v1582 = vsel %vm1581, %v1577, inf
    %1583 = vmin.xlane.f32.xlu0 %v1582
    %v1584 = vpop.xlane.xlu0 %1583
    %v1585 = vcvt.f32.s32 %v1584
    %v1586 = vcvt.f32.s32 %v1580
    %v1587 = vshll.u32 %v1586, 16
    %v1588 = vadd.s32 %v1587, %v1585
    %v1589 = vand.u32 %v1453, 65535
    %v1590 = vshra.s32 %v1453, 16
    %v1591 = vcvt.s32.f32 %v1589
    %v1592 = vcvt.s32.f32 %v1590
    %1593 = vmin.xlane.f32.xlu0 %v1592
    %v1594 = vpop.xlane.xlu0 %1593
    %vm1595 = vcmp.eq.f32.partialorder %v1592, %v1594
    %v1596 = vsel %vm1595, %v1591, inf
    %1597 = vmin.xlane.f32.xlu0 %v1596
    %v1598 = vpop.xlane.xlu0 %1597
    %v1599 = vcvt.f32.s32 %v1598
    %v1600 = vcvt.f32.s32 %v1594
    %v1601 = vshll.u32 %v1600, 16
    %v1602 = vadd.s32 %v1601, %v1599
    %v1603 = vand.u32 %v1454, 65535
    %v1604 = vshra.s32 %v1454, 16
    %v1605 = vcvt.s32.f32 %v1603
    %v1606 = vcvt.s32.f32 %v1604
    %1607 = vmin.xlane.f32.xlu0 %v1606
    %v1608 = vpop.xlane.xlu0 %1607
    %vm1609 = vcmp.eq.f32.partialorder %v1606, %v1608
    %v1610 = vsel %vm1609, %v1605, inf
    %1611 = vmin.xlane.f32.xlu0 %v1610
    %v1612 = vpop.xlane.xlu0 %1611
    %v1613 = vcvt.f32.s32 %v1612
    %v1614 = vcvt.f32.s32 %v1608
    %v1615 = vshll.u32 %v1614, 16
    %v1616 = vadd.s32 %v1615, %v1613
    %v1617 = vand.u32 %v1455, 65535
    %v1618 = vshra.s32 %v1455, 16
    %v1619 = vcvt.s32.f32 %v1617
    %v1620 = vcvt.s32.f32 %v1618
    %1621 = vmin.xlane.f32.xlu0 %v1620
    %v1622 = vpop.xlane.xlu0 %1621
    %vm1623 = vcmp.eq.f32.partialorder %v1620, %v1622
    %v1624 = vsel %vm1623, %v1619, inf
    %1625 = vmin.xlane.f32.xlu0 %v1624
    %v1626 = vpop.xlane.xlu0 %1625
    %v1627 = vcvt.f32.s32 %v1626
    %v1628 = vcvt.f32.s32 %v1622
    %v1629 = vshll.u32 %v1628, 16
    %v1630 = vadd.s32 %v1629, %v1627
    %v1631 = vand.u32 %v1456, 65535
    %v1632 = vshra.s32 %v1456, 16
    %v1633 = vcvt.s32.f32 %v1631
    %v1634 = vcvt.s32.f32 %v1632
    %1635 = vmin.xlane.f32.xlu0 %v1634
    %v1636 = vpop.xlane.xlu0 %1635
    %vm1637 = vcmp.eq.f32.partialorder %v1634, %v1636
    %v1638 = vsel %vm1637, %v1633, inf
    %1639 = vmin.xlane.f32.xlu0 %v1638
    %v1640 = vpop.xlane.xlu0 %1639
    %v1641 = vcvt.f32.s32 %v1640
    %v1642 = vcvt.f32.s32 %v1636
    %v1643 = vshll.u32 %v1642, 16
    %v1644 = vadd.s32 %v1643, %v1641
    %v1645 = vand.u32 %v1457, 65535
    %v1646 = vshra.s32 %v1457, 16
    %v1647 = vcvt.s32.f32 %v1645
    %v1648 = vcvt.s32.f32 %v1646
    %1649 = vmin.xlane.f32.xlu0 %v1648
    %v1650 = vpop.xlane.xlu0 %1649
    %vm1651 = vcmp.eq.f32.partialorder %v1648, %v1650
    %v1652 = vsel %vm1651, %v1647, inf
    %1653 = vmin.xlane.f32.xlu0 %v1652
    %v1654 = vpop.xlane.xlu0 %1653
    %v1655 = vcvt.f32.s32 %v1654
    %v1656 = vcvt.f32.s32 %v1650
    %v1657 = vshll.u32 %v1656, 16
    %v1658 = vadd.s32 %v1657, %v1655
    %v1659 = vand.u32 %v1458, 65535
    %v1660 = vshra.s32 %v1458, 16
    %v1661 = vcvt.s32.f32 %v1659
    %v1662 = vcvt.s32.f32 %v1660
    %1663 = vmin.xlane.f32.xlu0 %v1662
    %v1664 = vpop.xlane.xlu0 %1663
    %vm1665 = vcmp.eq.f32.partialorder %v1662, %v1664
    %v1666 = vsel %vm1665, %v1661, inf
    %1667 = vmin.xlane.f32.xlu0 %v1666
    %v1668 = vpop.xlane.xlu0 %1667
    %v1669 = vcvt.f32.s32 %v1668
    %v1670 = vcvt.f32.s32 %v1664
    %v1671 = vshll.u32 %v1670, 16
    %v1672 = vadd.s32 %v1671, %v1669
    %v1673 = vand.u32 %v1459, 65535
    %v1674 = vshra.s32 %v1459, 16
    %v1675 = vcvt.s32.f32 %v1673
    %v1676 = vcvt.s32.f32 %v1674
    %1677 = vmin.xlane.f32.xlu0 %v1676
    %v1678 = vpop.xlane.xlu0 %1677
    %vm1679 = vcmp.eq.f32.partialorder %v1676, %v1678
    %v1680 = vsel %vm1679, %v1675, inf
    %1681 = vmin.xlane.f32.xlu0 %v1680
    %v1682 = vpop.xlane.xlu0 %1681
    %v1683 = vcvt.f32.s32 %v1682
    %v1684 = vcvt.f32.s32 %v1678
    %v1685 = vshll.u32 %v1684, 16
    %v1686 = vadd.s32 %v1685, %v1683
    %v1687 = vand.u32 %v1460, 65535
    %v1688 = vshra.s32 %v1460, 16
    %v1689 = vcvt.s32.f32 %v1687
    %v1690 = vcvt.s32.f32 %v1688
    %1691 = vmin.xlane.f32.xlu0 %v1690
    %v1692 = vpop.xlane.xlu0 %1691
    %vm1693 = vcmp.eq.f32.partialorder %v1690, %v1692
    %v1694 = vsel %vm1693, %v1689, inf
    %1695 = vmin.xlane.f32.xlu0 %v1694
    %v1696 = vpop.xlane.xlu0 %1695
    %v1697 = vcvt.f32.s32 %v1696
    %v1698 = vcvt.f32.s32 %v1692
    %v1699 = vshll.u32 %v1698, 16
    %v1700 = vadd.s32 %v1699, %v1697
    %v1701 = vand.u32 %v1461, 65535
    %v1702 = vshra.s32 %v1461, 16
    %v1703 = vcvt.s32.f32 %v1701
    %v1704 = vcvt.s32.f32 %v1702
    %1705 = vmin.xlane.f32.xlu0 %v1704
    %v1706 = vpop.xlane.xlu0 %1705
    %vm1707 = vcmp.eq.f32.partialorder %v1704, %v1706
    %v1708 = vsel %vm1707, %v1703, inf
    %1709 = vmin.xlane.f32.xlu0 %v1708
    %v1710 = vpop.xlane.xlu0 %1709
    %v1711 = vcvt.f32.s32 %v1710
    %v1712 = vcvt.f32.s32 %v1706
    %v1713 = vshll.u32 %v1712, 16
    %v1714 = vadd.s32 %v1713, %v1711
    %v1715 = vand.u32 %v1462, 65535
    %v1716 = vshra.s32 %v1462, 16
    %v1717 = vcvt.s32.f32 %v1715
    %v1718 = vcvt.s32.f32 %v1716
    %1719 = vmin.xlane.f32.xlu0 %v1718
    %v1720 = vpop.xlane.xlu0 %1719
    %vm1721 = vcmp.eq.f32.partialorder %v1718, %v1720
    %v1722 = vsel %vm1721, %v1717, inf
    %1723 = vmin.xlane.f32.xlu0 %v1722
    %v1724 = vpop.xlane.xlu0 %1723
    %v1725 = vcvt.f32.s32 %v1724
    %v1726 = vcvt.f32.s32 %v1720
    %v1727 = vshll.u32 %v1726, 16
    %v1728 = vadd.s32 %v1727, %v1725
    %v1729 = vand.u32 %v1463, 65535
    %v1730 = vshra.s32 %v1463, 16
    %v1731 = vcvt.s32.f32 %v1729
    %v1732 = vcvt.s32.f32 %v1730
    %1733 = vmin.xlane.f32.xlu0 %v1732
    %v1734 = vpop.xlane.xlu0 %1733
    %vm1735 = vcmp.eq.f32.partialorder %v1732, %v1734
    %v1736 = vsel %vm1735, %v1731, inf
    %1737 = vmin.xlane.f32.xlu0 %v1736
    %v1738 = vpop.xlane.xlu0 %1737
    %v1739 = vcvt.f32.s32 %v1738
    %v1740 = vcvt.f32.s32 %v1734
    %v1741 = vshll.u32 %v1740, 16
    %v1742 = vadd.s32 %v1741, %v1739
    %v1743 = vand.u32 %v1464, 65535
    %v1744 = vshra.s32 %v1464, 16
    %v1745 = vcvt.s32.f32 %v1743
    %v1746 = vcvt.s32.f32 %v1744
    %1747 = vmin.xlane.f32.xlu0 %v1746
    %v1748 = vpop.xlane.xlu0 %1747
    %vm1749 = vcmp.eq.f32.partialorder %v1746, %v1748
    %v1750 = vsel %vm1749, %v1745, inf
    %1751 = vmin.xlane.f32.xlu0 %v1750
    %v1752 = vpop.xlane.xlu0 %1751
    %v1753 = vcvt.f32.s32 %v1752
    %v1754 = vcvt.f32.s32 %v1748
    %v1755 = vshll.u32 %v1754, 16
    %v1756 = vadd.s32 %v1755, %v1753
    %v1757 = vand.u32 %v1465, 65535
    %v1758 = vshra.s32 %v1465, 16
    %v1759 = vcvt.s32.f32 %v1757
    %v1760 = vcvt.s32.f32 %v1758
    %1761 = vmin.xlane.f32.xlu0 %v1760
    %v1762 = vpop.xlane.xlu0 %1761
    %vm1763 = vcmp.eq.f32.partialorder %v1760, %v1762
    %v1764 = vsel %vm1763, %v1759, inf
    %1765 = vmin.xlane.f32.xlu0 %v1764
    %v1766 = vpop.xlane.xlu0 %1765
    %v1767 = vcvt.f32.s32 %v1766
    %v1768 = vcvt.f32.s32 %v1762
    %v1769 = vshll.u32 %v1768, 16
    %v1770 = vadd.s32 %v1769, %v1767
    %v1771 = vand.u32 %v1466, 65535
    %v1772 = vshra.s32 %v1466, 16
    %v1773 = vcvt.s32.f32 %v1771
    %v1774 = vcvt.s32.f32 %v1772
    %1775 = vmin.xlane.f32.xlu0 %v1774
    %v1776 = vpop.xlane.xlu0 %1775
    %vm1777 = vcmp.eq.f32.partialorder %v1774, %v1776
    %v1778 = vsel %vm1777, %v1773, inf
    %1779 = vmin.xlane.f32.xlu0 %v1778
    %v1780 = vpop.xlane.xlu0 %1779
    %v1781 = vcvt.f32.s32 %v1780
    %v1782 = vcvt.f32.s32 %v1776
    %v1783 = vshll.u32 %v1782, 16
    %v1784 = vadd.s32 %v1783, %v1781
    %v1785 = vand.u32 %v1467, 65535
    %v1786 = vshra.s32 %v1467, 16
    %v1787 = vcvt.s32.f32 %v1785
    %v1788 = vcvt.s32.f32 %v1786
    %1789 = vmin.xlane.f32.xlu0 %v1788
    %v1790 = vpop.xlane.xlu0 %1789
    %vm1791 = vcmp.eq.f32.partialorder %v1788, %v1790
    %v1792 = vsel %vm1791, %v1787, inf
    %1793 = vmin.xlane.f32.xlu0 %v1792
    %v1794 = vpop.xlane.xlu0 %1793
    %v1795 = vcvt.f32.s32 %v1794
    %v1796 = vcvt.f32.s32 %v1790
    %v1797 = vshll.u32 %v1796, 16
    %v1798 = vadd.s32 %v1797, %v1795
    %v1799 = vand.u32 %v1468, 65535
    %v1800 = vshra.s32 %v1468, 16
    %v1801 = vcvt.s32.f32 %v1799
    %v1802 = vcvt.s32.f32 %v1800
    %1803 = vmin.xlane.f32.xlu0 %v1802
    %v1804 = vpop.xlane.xlu0 %1803
    %vm1805 = vcmp.eq.f32.partialorder %v1802, %v1804
    %v1806 = vsel %vm1805, %v1801, inf
    %1807 = vmin.xlane.f32.xlu0 %v1806
    %v1808 = vpop.xlane.xlu0 %1807
    %v1809 = vcvt.f32.s32 %v1808
    %v1810 = vcvt.f32.s32 %v1804
    %v1811 = vshll.u32 %v1810, 16
    %v1812 = vadd.s32 %v1811, %v1809
    %v1813 = vand.u32 %v1469, 65535
    %v1814 = vshra.s32 %v1469, 16
    %v1815 = vcvt.s32.f32 %v1813
    %v1816 = vcvt.s32.f32 %v1814
    %1817 = vmin.xlane.f32.xlu0 %v1816
    %v1818 = vpop.xlane.xlu0 %1817
    %vm1819 = vcmp.eq.f32.partialorder %v1816, %v1818
    %v1820 = vsel %vm1819, %v1815, inf
    %1821 = vmin.xlane.f32.xlu0 %v1820
    %v1822 = vpop.xlane.xlu0 %1821
    %v1823 = vcvt.f32.s32 %v1822
    %v1824 = vcvt.f32.s32 %v1818
    %v1825 = vshll.u32 %v1824, 16
    %v1826 = vadd.s32 %v1825, %v1823
    %v1827 = vand.u32 %v1470, 65535
    %v1828 = vshra.s32 %v1470, 16
    %v1829 = vcvt.s32.f32 %v1827
    %v1830 = vcvt.s32.f32 %v1828
    %1831 = vmin.xlane.f32.xlu0 %v1830
    %v1832 = vpop.xlane.xlu0 %1831
    %vm1833 = vcmp.eq.f32.partialorder %v1830, %v1832
    %v1834 = vsel %vm1833, %v1829, inf
    %1835 = vmin.xlane.f32.xlu0 %v1834
    %v1836 = vpop.xlane.xlu0 %1835
    %v1837 = vcvt.f32.s32 %v1836
    %v1838 = vcvt.f32.s32 %v1832
    %v1839 = vshll.u32 %v1838, 16
    %v1840 = vadd.s32 %v1839, %v1837
    %v1841 = vand.u32 %v1471, 65535
    %v1842 = vshra.s32 %v1471, 16
    %v1843 = vcvt.s32.f32 %v1841
    %v1844 = vcvt.s32.f32 %v1842
    %1845 = vmin.xlane.f32.xlu0 %v1844
    %v1846 = vpop.xlane.xlu0 %1845
    %vm1847 = vcmp.eq.f32.partialorder %v1844, %v1846
    %v1848 = vsel %vm1847, %v1843, inf
    %1849 = vmin.xlane.f32.xlu0 %v1848
    %v1850 = vpop.xlane.xlu0 %1849
    %v1851 = vcvt.f32.s32 %v1850
    %v1852 = vcvt.f32.s32 %v1846
    %v1853 = vshll.u32 %v1852, 16
    %v1854 = vadd.s32 %v1853, %v1851
    %v1855 = vand.u32 %v1472, 65535
    %v1856 = vshra.s32 %v1472, 16
    %v1857 = vcvt.s32.f32 %v1855
    %v1858 = vcvt.s32.f32 %v1856
    %1859 = vmin.xlane.f32.xlu0 %v1858
    %v1860 = vpop.xlane.xlu0 %1859
    %vm1861 = vcmp.eq.f32.partialorder %v1858, %v1860
    %v1862 = vsel %vm1861, %v1857, inf
    %1863 = vmin.xlane.f32.xlu0 %v1862
    %v1864 = vpop.xlane.xlu0 %1863
    %v1865 = vcvt.f32.s32 %v1864
    %v1866 = vcvt.f32.s32 %v1860
    %v1867 = vshll.u32 %v1866, 16
    %v1868 = vadd.s32 %v1867, %v1865
    %v1869 = vand.u32 %v1473, 65535
    %v1870 = vshra.s32 %v1473, 16
    %v1871 = vcvt.s32.f32 %v1869
    %v1872 = vcvt.s32.f32 %v1870
    %1873 = vmin.xlane.f32.xlu0 %v1872
    %v1874 = vpop.xlane.xlu0 %1873
    %vm1875 = vcmp.eq.f32.partialorder %v1872, %v1874
    %v1876 = vsel %vm1875, %v1871, inf
    %1877 = vmin.xlane.f32.xlu0 %v1876
    %v1878 = vpop.xlane.xlu0 %1877
    %v1879 = vcvt.f32.s32 %v1878
    %v1880 = vcvt.f32.s32 %v1874
    %v1881 = vshll.u32 %v1880, 16
    %v1882 = vadd.s32 %v1881, %v1879
    %v1883 = vand.u32 %v1474, 65535
    %v1884 = vshra.s32 %v1474, 16
    %v1885 = vcvt.s32.f32 %v1883
    %v1886 = vcvt.s32.f32 %v1884
    %1887 = vmin.xlane.f32.xlu0 %v1886
    %v1888 = vpop.xlane.xlu0 %1887
    %vm1889 = vcmp.eq.f32.partialorder %v1886, %v1888
    %v1890 = vsel %vm1889, %v1885, inf
    %1891 = vmin.xlane.f32.xlu0 %v1890
    %v1892 = vpop.xlane.xlu0 %1891
    %v1893 = vcvt.f32.s32 %v1892
    %v1894 = vcvt.f32.s32 %v1888
    %v1895 = vshll.u32 %v1894, 16
    %v1896 = vadd.s32 %v1895, %v1893
    %v1897 = vand.u32 %v1475, 65535
    %v1898 = vshra.s32 %v1475, 16
    %v1899 = vcvt.s32.f32 %v1897
    %v1900 = vcvt.s32.f32 %v1898
    %1901 = vmin.xlane.f32.xlu0 %v1900
    %v1902 = vpop.xlane.xlu0 %1901
    %vm1903 = vcmp.eq.f32.partialorder %v1900, %v1902
    %v1904 = vsel %vm1903, %v1899, inf
    %1905 = vmin.xlane.f32.xlu0 %v1904
    %v1906 = vpop.xlane.xlu0 %1905
    %v1907 = vcvt.f32.s32 %v1906
    %v1908 = vcvt.f32.s32 %v1902
    %v1909 = vshll.u32 %v1908, 16
    %v1910 = vadd.s32 %v1909, %v1907
    %v1911 = vand.u32 %v1476, 65535
    %v1912 = vshra.s32 %v1476, 16
    %v1913 = vcvt.s32.f32 %v1911
    %v1914 = vcvt.s32.f32 %v1912
    %1915 = vmin.xlane.f32.xlu0 %v1914
    %v1916 = vpop.xlane.xlu0 %1915
    %vm1917 = vcmp.eq.f32.partialorder %v1914, %v1916
    %v1918 = vsel %vm1917, %v1913, inf
    %1919 = vmin.xlane.f32.xlu0 %v1918
    %v1920 = vpop.xlane.xlu0 %1919
    %v1921 = vcvt.f32.s32 %v1920
    %v1922 = vcvt.f32.s32 %v1916
    %v1923 = vshll.u32 %v1922, 16
    %v1924 = vadd.s32 %v1923, %v1921
    %v1925 = vlaneseq
    %v1926 = vshrl.u32 %v1925, 7
    %v1927 = vsub.s32 %v64, %v1926
    %v1928 = vrot.slane %v1490, %v1927
    %v1929 = vadd.s32 %v64, 4294967288
    %v1930 = vlaneseq
    %v1931 = vshrl.u32 %v1930, 7
    %v1932 = vsub.s32 %v1929, %v1931
    %v1933 = vrot.slane %v1504, %v1932
    %vm1934 = vcmask 130112
    %v1935 = vsel %vm1934, %v1933, %v1928
    %v1936 = vadd.s32 %v64, 4294967280
    %v1937 = vlaneseq
    %v1938 = vshrl.u32 %v1937, 7
    %v1939 = vsub.s32 %v1936, %v1938
    %v1940 = vrot.slane %v1518, %v1939
    %vm1941 = vcmask 195712
    %v1942 = vsel %vm1941, %v1940, %v1935
    %v1943 = vadd.s32 %v64, 4294967272
    %v1944 = vlaneseq
    %v1945 = vshrl.u32 %v1944, 7
    %v1946 = vsub.s32 %v1943, %v1945
    %v1947 = vrot.slane %v1532, %v1946
    %vm1948 = vcmask 261312
    %v1949 = vsel %vm1948, %v1947, %v1942
    %v1950 = vadd.s32 %v64, 4294967264
    %v1951 = vlaneseq
    %v1952 = vshrl.u32 %v1951, 7
    %v1953 = vsub.s32 %v1950, %v1952
    %v1954 = vrot.slane %v1546, %v1953
    %vm1955 = vcmask 326912
    %v1956 = vsel %vm1955, %v1954, %v1949
    %v1957 = vadd.s32 %v64, 4294967256
    %v1958 = vlaneseq
    %v1959 = vshrl.u32 %v1958, 7
    %v1960 = vsub.s32 %v1957, %v1959
    %v1961 = vrot.slane %v1560, %v1960
    %vm1962 = vcmask 392512
    %v1963 = vsel %vm1962, %v1961, %v1956
    %v1964 = vadd.s32 %v64, 4294967248
    %v1965 = vlaneseq
    %v1966 = vshrl.u32 %v1965, 7
    %v1967 = vsub.s32 %v1964, %v1966
    %v1968 = vrot.slane %v1574, %v1967
    %vm1969 = vcmask 458112
    %v1970 = vsel %vm1969, %v1968, %v1963
    %v1971 = vadd.s32 %v64, 4294967240
    %v1972 = vlaneseq
    %v1973 = vshrl.u32 %v1972, 7
    %v1974 = vsub.s32 %v1971, %v1973
    %v1975 = vrot.slane %v1588, %v1974
    %vm1976 = vcmask 523712
    %v1977 = vsel %vm1976, %v1975, %v1970
    %v1978 = vadd.s32 %v64, 4294967232
    %v1979 = vlaneseq
    %v1980 = vshrl.u32 %v1979, 7
    %v1981 = vsub.s32 %v1978, %v1980
    %v1982 = vrot.slane %v1602, %v1981
    %vm1983 = vcmask 589312
    %v1984 = vsel %vm1983, %v1982, %v1977
    %v1985 = vadd.s32 %v64, 4294967224
    %v1986 = vlaneseq
    %v1987 = vshrl.u32 %v1986, 7
    %v1988 = vsub.s32 %v1985, %v1987
    %v1989 = vrot.slane %v1616, %v1988
    %vm1990 = vcmask 654912
    %v1991 = vsel %vm1990, %v1989, %v1984
    %v1992 = vadd.s32 %v64, 4294967216
    %v1993 = vlaneseq
    %v1994 = vshrl.u32 %v1993, 7
    %v1995 = vsub.s32 %v1992, %v1994
    %v1996 = vrot.slane %v1630, %v1995
    %vm1997 = vcmask 720512
    %v1998 = vsel %vm1997, %v1996, %v1991
    %v1999 = vadd.s32 %v64, 4294967208
    %v2000 = vlaneseq
    %v2001 = vshrl.u32 %v2000, 7
    %v2002 = vsub.s32 %v1999, %v2001
    %v2003 = vrot.slane %v1644, %v2002
    %vm2004 = vcmask 786112
    %v2005 = vsel %vm2004, %v2003, %v1998
    %v2006 = vadd.s32 %v64, 4294967200
    %v2007 = vlaneseq
    %v2008 = vshrl.u32 %v2007, 7
    %v2009 = vsub.s32 %v2006, %v2008
    %v2010 = vrot.slane %v1658, %v2009
    %vm2011 = vcmask 851712
    %v2012 = vsel %vm2011, %v2010, %v2005
    %v2013 = vadd.s32 %v64, 4294967192
    %v2014 = vlaneseq
    %v2015 = vshrl.u32 %v2014, 7
    %v2016 = vsub.s32 %v2013, %v2015
    %v2017 = vrot.slane %v1672, %v2016
    %vm2018 = vcmask 917312
    %v2019 = vsel %vm2018, %v2017, %v2012
    %v2020 = vadd.s32 %v64, 4294967184
    %v2021 = vlaneseq
    %v2022 = vshrl.u32 %v2021, 7
    %v2023 = vsub.s32 %v2020, %v2022
    %v2024 = vrot.slane %v1686, %v2023
    %vm2025 = vcmask 982912
    %v2026 = vsel %vm2025, %v2024, %v2019
    %v2027 = vadd.s32 %v64, 4294967176
    %v2028 = vlaneseq
    %v2029 = vshrl.u32 %v2028, 7
    %v2030 = vsub.s32 %v2027, %v2029
    %v2031 = vrot.slane %v1700, %v2030
    %vm2032 = vcmask 1048512
    %v2033 = vsel %vm2032, %v2031, %v2026
    %v2034 = vlaneseq
    %v2035 = vshrl.u32 %v2034, 7
    %v2036 = vsub.s32 %v64, %v2035
    %v2037 = vrot.slane %v1714, %v2036
    %v2038 = vlaneseq
    %v2039 = vshrl.u32 %v2038, 7
    %v2040 = vsub.s32 %v1929, %v2039
    %v2041 = vrot.slane %v1728, %v2040
    %v2042 = vsel %vm1934, %v2041, %v2037
    %v2043 = vlaneseq
    %v2044 = vshrl.u32 %v2043, 7
    %v2045 = vsub.s32 %v1936, %v2044
    %v2046 = vrot.slane %v1742, %v2045
    %v2047 = vsel %vm1941, %v2046, %v2042
    %v2048 = vlaneseq
    %v2049 = vshrl.u32 %v2048, 7
    %v2050 = vsub.s32 %v1943, %v2049
    %v2051 = vrot.slane %v1756, %v2050
    %v2052 = vsel %vm1948, %v2051, %v2047
    %v2053 = vlaneseq
    %v2054 = vshrl.u32 %v2053, 7
    %v2055 = vsub.s32 %v1950, %v2054
    %v2056 = vrot.slane %v1770, %v2055
    %v2057 = vsel %vm1955, %v2056, %v2052
    %v2058 = vlaneseq
    %v2059 = vshrl.u32 %v2058, 7
    %v2060 = vsub.s32 %v1957, %v2059
    %v2061 = vrot.slane %v1784, %v2060
    %v2062 = vsel %vm1962, %v2061, %v2057
    %v2063 = vlaneseq
    %v2064 = vshrl.u32 %v2063, 7
    %v2065 = vsub.s32 %v1964, %v2064
    %v2066 = vrot.slane %v1798, %v2065
    %v2067 = vsel %vm1969, %v2066, %v2062
    %v2068 = vlaneseq
    %v2069 = vshrl.u32 %v2068, 7
    %v2070 = vsub.s32 %v1971, %v2069
    %v2071 = vrot.slane %v1812, %v2070
    %v2072 = vsel %vm1976, %v2071, %v2067
    %v2073 = vlaneseq
    %v2074 = vshrl.u32 %v2073, 7
    %v2075 = vsub.s32 %v1978, %v2074
    %v2076 = vrot.slane %v1826, %v2075
    %v2077 = vsel %vm1983, %v2076, %v2072
    %v2078 = vlaneseq
    %v2079 = vshrl.u32 %v2078, 7
    %v2080 = vsub.s32 %v1985, %v2079
    %v2081 = vrot.slane %v1840, %v2080
    %v2082 = vsel %vm1990, %v2081, %v2077
    %v2083 = vlaneseq
    %v2084 = vshrl.u32 %v2083, 7
    %v2085 = vsub.s32 %v1992, %v2084
    %v2086 = vrot.slane %v1854, %v2085
    %v2087 = vsel %vm1997, %v2086, %v2082
    %v2088 = vlaneseq
    %v2089 = vshrl.u32 %v2088, 7
    %v2090 = vsub.s32 %v1999, %v2089
    %v2091 = vrot.slane %v1868, %v2090
    %v2092 = vsel %vm2004, %v2091, %v2087
    %v2093 = vlaneseq
    %v2094 = vshrl.u32 %v2093, 7
    %v2095 = vsub.s32 %v2006, %v2094
    %v2096 = vrot.slane %v1882, %v2095
    %v2097 = vsel %vm2011, %v2096, %v2092
    %v2098 = vlaneseq
    %v2099 = vshrl.u32 %v2098, 7
    %v2100 = vsub.s32 %v2013, %v2099
    %v2101 = vrot.slane %v1896, %v2100
    %v2102 = vsel %vm2018, %v2101, %v2097
    %v2103 = vlaneseq
    %v2104 = vshrl.u32 %v2103, 7
    %v2105 = vsub.s32 %v2020, %v2104
    %v2106 = vrot.slane %v1910, %v2105
    %v2107 = vsel %vm2025, %v2106, %v2102
    %v2108 = vlaneseq
    %v2109 = vshrl.u32 %v2108, 7
    %v2110 = vsub.s32 %v2027, %v2109
    %v2111 = vrot.slane %v1924, %v2110
    %v2112 = vsel %vm2032, %v2111, %v2107
    %vm2113 = vcmask 1041409
    %v2114 = vsel %vm2113, %v2112, %v2033
    %2115 = vst [vmem:[#allocation4] sm:$0x3] %v2114
    // Predicated region
    $region18: #{tpu_custom_call.1} parent=1 // pred_check
      _
    $region19: #{tpu_custom_call.1} parent=1 // pred_check_branch
      %2117 = sbr.rel (0) target = $region21
    $region20: #{tpu_custom_call.1} parent=1 // pred_region
      %s2119 = ssub.s32 4096, 4096
      %2120 = vsyncadd [#allocation3], %s2119
      %s2121 = sshll.u32 [#allocation2], 4
      %s2122 = int_to_ptr.vmem [resolvable:$true] %s2121
      %2127 = dma.vmem_to_hbm [thread:$0]  %s2122, 4096, %s4, [#allocation3], 128, 128, 8
    $region21: #{tpu_custom_call.1} parent=1 // pred_fallthru
      _
    // Predicated region
    $region22: #{tpu_custom_call.1} parent=1 // pred_check
      _
    $region23: #{tpu_custom_call.1} parent=1 // pred_check_branch
      %2129 = sbr.rel (0) target = $region25
    $region24: #{tpu_custom_call.1} parent=1 // pred_region
      %s2131 = ssub.s32 32, 32
      %2132 = vsyncadd [#allocation5], %s2131
      %s2134 = sshll.u32 [#allocation4], 4
      %s2135 = int_to_ptr.vmem [resolvable:$true] %s2134
      %2137 = dma.vmem_to_hbm [thread:$0]  %s2135, 32, %s5, [#allocation5]
    $region25: #{tpu_custom_call.1} parent=1 // pred_fallthru
      _
    // Predicated region
    $region26: #{tpu_custom_call.1} parent=1 // pred_check
      _
    $region27: #{tpu_custom_call.1} parent=1 // pred_check_branch
      %2139 = sbr.rel (0) target = $region29
    $region28: #{tpu_custom_call.1} parent=1 // pred_region
      %2140 = dma.done [#allocation3], 4096
    $region29: #{tpu_custom_call.1} parent=1 // pred_fallthru
      _
    // Predicated region
    $region30: #{tpu_custom_call.1} parent=1 // pred_check
      _
    $region31: #{tpu_custom_call.1} parent=1 // pred_check_branch
      %2142 = sbr.rel (0) target = $region33
    $region32: #{tpu_custom_call.1} parent=1 // pred_region
      %2143 = dma.done [#allocation5], 32
    $region33: #{tpu_custom_call.1} parent=1 // pred_fallthru
      _
    %2144 = vsyncpa [#allocation3], 1
    %2145 = vsyncpa [#allocation5], 1

</llo_original>
